<compile_context>
chip_gen: v7x
topology: tpu7x:2x2x1
jax: 0.10.0
libtpu: 0.0.40
codegen_flags: <defaults>
</compile_context>

<pallas_src>
import functools

import jax
import jax.numpy as jnp
from jax.experimental import pallas as pl
from jax.experimental.pallas import tpu as pltpu

_MIB = 1024 * 1024


def _round_up(n, m):
    return (n + m - 1) // m * m


# ----------------------------- hardware queries ----------------------------- #
def _device_kind():
    try:
        return jax.devices()[0].device_kind.lower()
    except Exception:
        return ""


def _tpu_vmem_bytes():
    """Physical per-core VMEM (128 MiB v5e/v6e, 64 MiB v7x)."""
    try:
        return int(pltpu.get_tpu_info().vmem_capacity_bytes)
    except Exception:
        return 64 * _MIB if "v7" in _device_kind() else 128 * _MIB


def _bf16_vpu_ok():
    """bf16 VPU/EUP only exists on v6e / v7x; keep gating f32 elsewhere."""
    kind = _device_kind()
    return ("v6" in kind) or ("v7" in kind)


# ------------------------------ Pallas kernel ------------------------------- #
def joint_kernel(xp_ref, yp_ref, w2_ref, b2_ref, out_ref, *, gate_dtype):
    """Joint network over one (batch, T-tile) block.

    xp_ref : (1, tT, 2Hp)   encoder states pre-projected by [W1x | Wgx]
    yp_ref : (1, Up, 2Hp)   decoder states pre-projected by [W1y | Wgy] + [b1|bg]
    w2_ref : (Hp, Vp)       fc2 weight (zero padded, single-buffered)
    b2_ref : (1, Vp)        fc2 bias; padded vocab lanes hold -1e30
    out    : (1, tT, Up, Vp) log-probabilities
    """
    Hp, Vp = w2_ref.shape
    xp = xp_ref[0].astype(gate_dtype)          # (tT, 2Hp)
    yp = yp_ref[0].astype(gate_dtype)          # (Up, 2Hp)
    tT = xp.shape[0]
    Up = yp.shape[0]

    # fc1 / fc_gate pre-activations: cheap broadcast adds (the matmuls were
    # hoisted to XLA, so nothing here is recomputed per T tile).
    pre1 = xp[:, None, :Hp] + yp[None, :, :Hp]          # (tT, Up, Hp)
    preg = xp[:, None, Hp:] + yp[None, :, Hp:]          # (tT, Up, Hp)
    # bf16 VPU/EUP on v6e/v7x, f32 on v5e (chosen by the caller).
    z = (jnp.tanh(pre1) * jax.nn.sigmoid(preg)).astype(w2_ref.dtype)

    # fc2: the only MXU matmul left in the kernel; M = tT*Up rows, f32 acc.
    logits = jnp.dot(z.reshape(tT * Up, Hp), w2_ref[...],
                     preferred_element_type=jnp.float32) + b2_ref[...]  # (tT*Up, Vp)

    # log_softmax over the padded vocab dim; padded lanes sit at ~-1e30 so
    # they never win the max and exp() underflows to 0.
    m = jnp.max(logits, axis=-1, keepdims=True)
    s = logits - m
    e = jnp.exp(s.astype(gate_dtype)).astype(jnp.float32)
    lse = jnp.log(jnp.sum(e, axis=-1, keepdims=True))
    out_ref[...] = (s - lse).astype(out_ref.dtype).reshape(1, tT, Up, Vp)


# --------------------------- VMEM model / tiling ---------------------------- #
def _tile_vmem_bytes(tT, Up, Hp, Vp, act_bytes, out_bytes):
    """Bytes resident in VMEM for one grid step (conservative)."""
    fixed = (Hp * Vp * act_bytes                 # W2 (single-buffered)
             + Vp * 4                            # b2 (single-buffered)
             + 2 * Up * 2 * Hp * act_bytes)      # yp block (double-buffered)
    per_tile = (2 * tT * 2 * Hp * act_bytes      # xp block (double-buffered)
                + 2 * tT * Up * Vp * out_bytes   # out block (double-buffered)
                + 3 * tT * Up * Hp * 4           # pre1 / preg / z (f32-equiv)
                + 3 * tT * Up * Vp * 4)          # logits / shifted / exp
    return fixed + per_tile


def _pick_t_tile(B, T, Up, Hp, Vp, act_bytes, out_bytes, budget_bytes):
    if T % 8 != 0:
        # Only tT == T keeps the (8,128) constraint on the (1, tT, 2Hp) xp
        # block without masking (block == full dim is always legal).
        return T
    cands = [d for d in range(8, T + 1, 8) if T % d == 0]
    fitting = [d for d in cands
               if _tile_vmem_bytes(d, Up, Hp, Vp, act_bytes, out_bytes) <= budget_bytes]
    if not fitting:
        return cands[0]          # smallest legal tile (model says VMEM is tight)
    # Prefer a tile count that keeps the grid product even, so both v7x
    # TensorCores get equal work under "parallel" semantics.
    even = [d for d in fitting if (B * (T // d)) % 2 == 0]
    return max(even) if even else max(fitting)


# ------------------------------ joint wrapper -------------------------------- #
def joint_pallas(x_enc, y_dec, W1, b1, Wg, bg, W2, b2, *,
                 mxu_dtype=jnp.bfloat16, gate_dtype=None,
                 out_dtype=jnp.float32, trim=True):
    """x_enc: (B,T,H), y_dec: (B,U,H) -> (B,T,U,V) log-probs (trim=True).

    mxu_dtype : MXU operand / kernel activation dtype (bf16 default on every
                TPU generation; accumulation is always f32).
    gate_dtype: dtype for tanh/sigmoid/exp; None -> bf16 on v6e/v7x, f32 on v5e.
    out_dtype : emitted log-prob dtype (bf16 halves writeback if tolerable).
    trim      : slice the padded (Up,Vp) output back to (U,V); set False to
                keep the padded tensor and skip that HBM copy.
    """
    B, T, H = x_enc.shape
    U = y_dec.shape[1]
    V = W2.shape[1]
    Hp = _round_up(H, 128)
    Vp = _round_up(V, 128)
    Up = _round_up(U, 8)
    if gate_dtype is None:
        gate_dtype = jnp.bfloat16 if _bf16_vpu_ok() else jnp.float32
    act_dtype = mxu_dtype

    # ---- hoisted fc1 / fc_gate projections (shared across all T tiles) ---- #
    # The module concatenates (encoder, decoder) along dim=-1, so the first H
    # rows of W1/Wg multiply the encoder half and the last H rows the decoder.
    def proj(states, w_fc1_half, w_gate_half, bias=None):
        left = states @ w_fc1_half               # (B, S, H)  fc1 half
        right = states @ w_gate_half             # (B, S, H)  gate half
        if bias is not None:
            left = left + bias[0]
            right = right + bias[1]
        pad = ((0, 0), (0, 0), (0, Hp - H))
        return jnp.concatenate([jnp.pad(left, pad), jnp.pad(right, pad)], axis=-1)

    xp = proj(x_enc, W1[:H], Wg[:H])                        # (B, T, 2Hp)
    yp = proj(y_dec, W1[H:], Wg[H:], bias=(b1, bg))         # (B, U, 2Hp)
    yp = jnp.pad(yp, ((0, 0), (0, Up - U), (0, 0)))         # (B, Up, 2Hp)
    xp = xp.astype(act_dtype)
    yp = yp.astype(act_dtype)

    W2p = jnp.pad(W2, ((0, Hp - H), (0, Vp - V))).astype(act_dtype)
    b2p = jnp.full((1, Vp), -1e30, jnp.float32).at[0, :V].set(b2)

    # ---- generation-aware VMEM budget and T tiling ------------------------ #
    phys_vmem = _tpu_vmem_bytes()
    vmem_limit = int(min(phys_vmem - 16 * _MIB, 100 * _MIB))   # 48 MiB v7x, 100 MiB v5e/v6e
    act_bytes = jnp.dtype(act_dtype).itemsize
    out_bytes = jnp.dtype(out_dtype).itemsize
    tT = _pick_t_tile(B, T, Up, Hp, Vp, act_bytes, out_bytes,
                      budget_bytes=int(0.9 * vmem_limit))
    grid = (B, T // tT)

    kernel = functools.partial(joint_kernel, gate_dtype=gate_dtype)

    def call(single_buffer_consts):
        def const_spec(shape):
            idx = lambda b, t: (0,) * len(shape)
            if single_buffer_consts:
                # index_map never changes -> the second pipeline buffer is
                # pure VMEM waste; single-buffer the resident weights.
                return pl.BlockSpec(shape, idx, pipeline_mode=pl.Buffered(1))
            return pl.BlockSpec(shape, idx)

        return pl.pallas_call(
            kernel,
            out_shape=jax.ShapeDtypeStruct((B, T, Up, Vp), out_dtype),
            grid=grid,
            in_specs=[
                pl.BlockSpec((1, tT, 2 * Hp), lambda b, t: (b, t, 0)),  # xp T-tile
                pl.BlockSpec((1, Up, 2 * Hp), lambda b, t: (b, 0, 0)),  # yp per-batch
                const_spec((Hp, Vp)),                                   # W2
                const_spec((1, Vp)),                                    # b2 (pad=-1e30)
            ],
            out_specs=pl.BlockSpec((1, tT, Up, Vp), lambda b, t: (b, t, 0, 0)),
            compiler_params=pltpu.CompilerParams(
                # both grid axes are independent -> megacore sharding on v7x
                dimension_semantics=("parallel", "parallel"),
                vmem_limit_bytes=vmem_limit,
            ),
        )(xp, yp, W2p, b2p)

    try:
        out = call(single_buffer_consts=True)
    except Exception:
        # pl.Buffered(1) unsupported in this build -> default double-buffering.
        out = call(single_buffer_consts=False)

    # TODO(synk): for production vocabularies (V >= ~2k) on v7x, tile V as a
    # third ("arbitrary") grid axis with a two-pass log-softmax instead of
    # materializing (tT*Up, Vp) logits, and keep the padded output downstream
    # instead of this trim copy.
    if trim:
        out = out[:, :, :U, :V]
    return out


# -------------------------------- JAX glue ----------------------------------- #
def lstm_forward(x, w_ih, w_hh, b_ih, b_hh):
    """PyTorch-semantics single-layer unidirectional LSTM, batch_first.

    x: (B, T, D); w_ih: (4H, D); w_hh: (4H, H); gate order i, f, g, o.
    Returns (B, T, H).
    """
    B = x.shape[0]
    H = w_hh.shape[1]

    def step(carry, xt):
        h, c = carry
        gates = xt @ w_ih.T + b_ih + h @ w_hh.T + b_hh
        i, f, g, o = jnp.split(gates, 4, axis=-1)
        i = jax.nn.sigmoid(i)
        f = jax.nn.sigmoid(f)
        g = jnp.tanh(g)
        o = jax.nn.sigmoid(o)
        c = f * c + i * g
        h = o * jnp.tanh(c)
        return (h, c), h

    h0 = jnp.zeros((B, H), jnp.float32)
    c0 = jnp.zeros((B, H), jnp.float32)
    _, ys = jax.lax.scan(step, (h0, c0), jnp.swapaxes(x, 0, 1))
    return jnp.swapaxes(ys, 0, 1)


def transducer_forward(params, x, y, **joint_kwargs):
    """Mirrors Net.forward(x, y, x_len=full, softmax=True)."""
    # encoder (pack/unpack with full lengths == plain LSTM)
    x_enc = lstm_forward(x, *params["enc"])                     # (B, T, H)

    # SOS prepend + embedding + decoder LSTM
    B = y.shape[0]
    sos = jnp.zeros((B, 1), jnp.int32)
    y_full = jnp.concatenate([sos, y], axis=1)                  # (B, U)
    y_emb = params["embed"][y_full]                             # (B, U, E)
    y_dec = lstm_forward(y_emb, *params["dec"])                 # (B, U, H)

    # joint network (Pallas kernel)
    return joint_pallas(x_enc, y_dec,
                        params["W1"], params["b1"],
                        params["Wg"], params["bg"],
                        params["W2"], params["b2"],
                        **joint_kwargs)


def joint_reference(x_enc, y_dec, W1, b1, Wg, bg, W2, b2):
    """Pure-JAX reference of the joint (for sanity checking the kernel)."""
    T = x_enc.shape[1]
    U = y_dec.shape[1]
    xe = jnp.broadcast_to(x_enc[:, :, None, :],
                          (x_enc.shape[0], T, U, x_enc.shape[-1]))
    ye = jnp.broadcast_to(y_dec[:, None, :, :],
                          (y_dec.shape[0], T, U, y_dec.shape[-1]))
    cat = jnp.concatenate([xe, ye], axis=-1)
    z = jnp.tanh(cat @ W1 + b1) * jax.nn.sigmoid(cat @ Wg + bg)
    logits = z @ W2 + b2
    return jax.nn.log_softmax(logits, axis=-1)


# ----------------------------------- main ------------------------------------ #
if __name__ == "__main__":
    # small, module-consistent sizes
    B, T, U_lbl = 2, 8, 8
    input_dim, hid_dim, embd_dim, output_dim = 8, 32, 16, 16
    padding_idx = output_dim  # last row of the (V+1)-row embedding table

    key = jax.random.PRNGKey(0)
    ks = jax.random.split(key, 16)

    def rnd(k, shape, scale=0.1):
        return scale * jax.random.normal(k, shape, jnp.float32)

    H, E, V = hid_dim, embd_dim, output_dim
    params = {
        "enc": (rnd(ks[0], (4 * H, input_dim)), rnd(ks[1], (4 * H, H)),
                rnd(ks[2], (4 * H,)), rnd(ks[3], (4 * H,))),
        "dec": (rnd(ks[4], (4 * H, E)), rnd(ks[5], (4 * H, H)),
                rnd(ks[6], (4 * H,)), rnd(ks[7], (4 * H,))),
        "embed": rnd(ks[8], (V + 1, E)).at[padding_idx].set(0.0),
        "W1": rnd(ks[9], (2 * H, H)), "b1": rnd(ks[10], (H,)),
        "Wg": rnd(ks[11], (2 * H, H)), "bg": rnd(ks[12], (H,)),
        "W2": rnd(ks[13], (H, V)), "b2": rnd(ks[14], (V,)),
    }

    x = jax.random.normal(jax.random.PRNGKey(1), (B, T, input_dim), jnp.float32)
    y = jax.random.randint(jax.random.PRNGKey(2), (B, U_lbl), 1, output_dim,
                           dtype=jnp.int32)

    # default optimized path: bf16 MXU operands on every generation,
    # gen-aware gating dtype, f32 log-prob output
    out = transducer_forward(params, x, y)
    out = jax.block_until_ready(out)
    assert out.shape == (B, T, U_lbl + 1, output_dim)

    # pure-JAX reference of the joint
    x_enc = lstm_forward(x, *params["enc"])
    sos = jnp.zeros((B, 1), jnp.int32)
    y_emb = params["embed"][jnp.concatenate([sos, y], axis=1)]
    y_dec = lstm_forward(y_emb, *params["dec"])
    ref = joint_reference(x_enc, y_dec,
                          params["W1"], params["b1"],
                          params["Wg"], params["bg"],
                          params["W2"], params["b2"])

    # mixed-precision default path: loose tolerance (bf16 operands / gating)
    assert jnp.allclose(out, ref, rtol=3e-2, atol=3e-2), "bf16 path mismatch"

    # strict f32 path: validates the kernel logic exactly
    out_f32 = joint_pallas(x_enc, y_dec,
                           params["W1"], params["b1"],
                           params["Wg"], params["bg"],
                           params["W2"], params["b2"],
                           mxu_dtype=jnp.float32, gate_dtype=jnp.float32)
    out_f32 = jax.block_until_ready(out_f32)
    assert jnp.allclose(out_f32, ref, rtol=1e-3, atol=1e-3), "f32 path mismatch"

    print("KERNEL_OK")
</pallas_src>

<mosaic_0001>
module attributes {stable_mosaic.version = 11 : i64} {
  func.func @joint_kernel(%arg0: i32, %arg1: i32, %arg2: memref<1x8x256xbf16, #tpu.memory_space<vmem>>, %arg3: memref<1x16x256xbf16, #tpu.memory_space<vmem>>, %arg4: memref<128x128xbf16, #tpu.memory_space<vmem>>, %arg5: memref<1x128xf32, #tpu.memory_space<vmem>>, %arg6: memref<1x8x16x128xf32, #tpu.memory_space<vmem>>) attributes {dimension_semantics = [#tpu.dimension_semantics<parallel>, #tpu.dimension_semantics<parallel>], iteration_bounds = array<i64: 2, 1>, scalar_prefetch = 0 : i64, scratch_operands = 0 : i64, tpu.core_type = #tpu.core_type<tc>, window_params = [{transform_indices = @transform_0, window_bounds = array<i64: 1, 8, 256>}, {transform_indices = @transform_1, window_bounds = array<i64: 1, 16, 256>}, {pipeline_mode = #tpu.pipeline_mode<synchronous>, transform_indices = @transform_2, window_bounds = array<i64: 128, 128>}, {pipeline_mode = #tpu.pipeline_mode<synchronous>, transform_indices = @transform_3, window_bounds = array<i64: 1, 128>}, {transform_indices = @transform_4, window_bounds = array<i64: 1, 8, 16, 128>}]} {
    %c0 = arith.constant 0 : index
    %c0_0 = arith.constant 0 : index
    %c0_1 = arith.constant 0 : index
    %0 = vector.load %arg2[%c0, %c0_0, %c0_1] : memref<1x8x256xbf16, #tpu.memory_space<vmem>>, vector<1x8x256xbf16>
    %1 = vector.shape_cast %0 : vector<1x8x256xbf16> to vector<8x256xbf16>
    %2 = arith.extf %1 : vector<8x256xbf16> to vector<8x256xf32>
    %c0_2 = arith.constant 0 : index
    %c0_3 = arith.constant 0 : index
    %c0_4 = arith.constant 0 : index
    %3 = vector.load %arg3[%c0_2, %c0_3, %c0_4] : memref<1x16x256xbf16, #tpu.memory_space<vmem>>, vector<1x16x256xbf16>
    %4 = vector.shape_cast %3 : vector<1x16x256xbf16> to vector<16x256xbf16>
    %5 = arith.extf %4 : vector<16x256xbf16> to vector<16x256xf32>
    %6 = vector.extract_strided_slice %2 {offsets = [0, 0], sizes = [8, 128], strides = [1, 1]} : vector<8x256xf32> to vector<8x128xf32>
    %7 = vector.shape_cast %6 : vector<8x128xf32> to vector<8x1x128xf32>
    %8 = vector.extract_strided_slice %5 {offsets = [0, 0], sizes = [16, 128], strides = [1, 1]} : vector<16x256xf32> to vector<16x128xf32>
    %9 = vector.shape_cast %8 : vector<16x128xf32> to vector<1x16x128xf32>
    %10 = vector.broadcast %7 : vector<8x1x128xf32> to vector<8x16x128xf32>
    %11 = vector.broadcast %9 : vector<1x16x128xf32> to vector<8x16x128xf32>
    %12 = arith.addf %10, %11 : vector<8x16x128xf32>
    %13 = vector.extract_strided_slice %2 {offsets = [0, 128], sizes = [8, 128], strides = [1, 1]} : vector<8x256xf32> to vector<8x128xf32>
    %14 = vector.shape_cast %13 : vector<8x128xf32> to vector<8x1x128xf32>
    %15 = vector.extract_strided_slice %5 {offsets = [0, 128], sizes = [16, 128], strides = [1, 1]} : vector<16x256xf32> to vector<16x128xf32>
    %16 = vector.shape_cast %15 : vector<16x128xf32> to vector<1x16x128xf32>
    %17 = vector.broadcast %14 : vector<8x1x128xf32> to vector<8x16x128xf32>
    %18 = vector.broadcast %16 : vector<1x16x128xf32> to vector<8x16x128xf32>
    %19 = arith.addf %17, %18 : vector<8x16x128xf32>
    %20 = math.tanh %12 : vector<8x16x128xf32>
    %21 = arith.negf %19 : vector<8x16x128xf32>
    %22 = math.exp %21 : vector<8x16x128xf32>
    %cst = arith.constant 1.000000e+00 : f32
    %23 = vector.broadcast %cst : f32 to vector<8x16x128xf32>
    %24 = arith.addf %23, %22 : vector<8x16x128xf32>
    %25 = arith.divf %23, %24 : vector<8x16x128xf32>
    %26 = arith.mulf %20, %25 : vector<8x16x128xf32>
    %27 = arith.truncf %26 : vector<8x16x128xf32> to vector<8x16x128xbf16>
    %28 = vector.shape_cast %27 : vector<8x16x128xbf16> to vector<128x128xbf16>
    %c0_5 = arith.constant 0 : index
    %c0_6 = arith.constant 0 : index
    %29 = vector.load %arg4[%c0_5, %c0_6] : memref<128x128xbf16, #tpu.memory_space<vmem>>, vector<128x128xbf16>
    %cst_7 = arith.constant dense<0.000000e+00> : vector<128x128xf32>
    %30 = tpu.matmul %28, %29, %cst_7 {dimension_numbers = #tpu.dot_dimension_numbers<[1], [0], [0], [1], [0, 0, 1, 1], [], []>} : vector<128x128xbf16>, vector<128x128xbf16>, vector<128x128xf32> -> vector<128x128xf32>
    %c0_8 = arith.constant 0 : index
    %c0_9 = arith.constant 0 : index
    %31 = vector.load %arg5[%c0_8, %c0_9] : memref<1x128xf32, #tpu.memory_space<vmem>>, vector<1x128xf32>
    %32 = vector.broadcast %31 : vector<1x128xf32> to vector<128x128xf32>
    %33 = arith.addf %30, %32 : vector<128x128xf32>
    %cst_10 = arith.constant dense<0xFF800000> : vector<128xf32>
    %34 = vector.multi_reduction <maximumf>, %33, %cst_10 [1] : vector<128x128xf32> to vector<128xf32>
    %35 = vector.shape_cast %34 : vector<128xf32> to vector<128x1xf32>
    %36 = vector.broadcast %35 : vector<128x1xf32> to vector<128x128xf32>
    %37 = arith.subf %33, %36 : vector<128x128xf32>
    %38 = math.exp %37 : vector<128x128xf32>
    %cst_11 = arith.constant dense<0.000000e+00> : vector<128xf32>
    %39 = vector.multi_reduction <add>, %38, %cst_11 [1] : vector<128x128xf32> to vector<128xf32>
    %40 = vector.shape_cast %39 : vector<128xf32> to vector<128x1xf32>
    %41 = math.log %40 : vector<128x1xf32>
    %42 = vector.broadcast %41 : vector<128x1xf32> to vector<128x128xf32>
    %43 = arith.subf %37, %42 : vector<128x128xf32>
    %44 = vector.shape_cast %43 : vector<128x128xf32> to vector<1x8x16x128xf32>
    %c0_12 = arith.constant 0 : index
    %c0_13 = arith.constant 0 : index
    %c0_14 = arith.constant 0 : index
    %c0_15 = arith.constant 0 : index
    %45 = vector.load %arg6[%c0_12, %c0_13, %c0_14, %c0_15] : memref<1x8x16x128xf32, #tpu.memory_space<vmem>>, vector<1x8x16x128xf32>
    tpu.vector_store %arg6[%c0_12, %c0_13, %c0_14, %c0_15], %44 {strides = array<i32>} : memref<1x8x16x128xf32, #tpu.memory_space<vmem>>, vector<1x8x16x128xf32>,
    return
  }
  func.func @transform_0(%arg0: i32, %arg1: i32) -> (i32, i32, i32) {
    %c0_i32 = arith.constant 0 : i32
    %c0_i32_0 = arith.constant 0 : i32
    return %arg0, %arg1, %c0_i32 : i32, i32, i32
  }
  func.func @transform_1(%arg0: i32, %arg1: i32) -> (i32, i32, i32) {
    %c0_i32 = arith.constant 0 : i32
    %c0_i32_0 = arith.constant 0 : i32
    %c0_i32_1 = arith.constant 0 : i32
    return %arg0, %c0_i32, %c0_i32_0 : i32, i32, i32
  }
  func.func @transform_2(%arg0: i32, %arg1: i32) -> (i32, i32) {
    %c0_i32 = arith.constant 0 : i32
    %c0_i32_0 = arith.constant 0 : i32
    %c0_i32_1 = arith.constant 0 : i32
    return %c0_i32, %c0_i32_0 : i32, i32
  }
  func.func @transform_3(%arg0: i32, %arg1: i32) -> (i32, i32) {
    %c0_i32 = arith.constant 0 : i32
    %c0_i32_0 = arith.constant 0 : i32
    %c0_i32_1 = arith.constant 0 : i32
    return %c0_i32, %c0_i32_0 : i32, i32
  }
  func.func @transform_4(%arg0: i32, %arg1: i32) -> (i32, i32, i32, i32) {
    %c0_i32 = arith.constant 0 : i32
    %c0_i32_0 = arith.constant 0 : i32
    %c0_i32_1 = arith.constant 0 : i32
    return %arg0, %arg1, %c0_i32, %c0_i32_0 : i32, i32, i32, i32
  }
}

module attributes {stable_mosaic.version = 11 : i64} {
  func.func @joint_kernel(%arg0: i32, %arg1: i32, %arg2: memref<1x8x256xbf16, #tpu.memory_space<vmem>>, %arg3: memref<1x16x256xbf16, #tpu.memory_space<vmem>>, %arg4: memref<128x128xbf16, #tpu.memory_space<vmem>>, %arg5: memref<1x128xf32, #tpu.memory_space<vmem>>, %arg6: memref<1x8x16x128xf32, #tpu.memory_space<vmem>>) attributes {dimension_semantics = [#tpu.dimension_semantics<parallel>, #tpu.dimension_semantics<parallel>], iteration_bounds = array<i64: 2, 1>, scalar_prefetch = 0 : i64, scratch_operands = 0 : i64, tpu.core_type = #tpu.core_type<tc>, window_params = [{transform_indices = @transform_0, window_bounds = array<i64: 1, 8, 256>}, {transform_indices = @transform_1, window_bounds = array<i64: 1, 16, 256>}, {pipeline_mode = #tpu.pipeline_mode<synchronous>, transform_indices = @transform_2, window_bounds = array<i64: 128, 128>}, {pipeline_mode = #tpu.pipeline_mode<synchronous>, transform_indices = @transform_3, window_bounds = array<i64: 1, 128>}, {transform_indices = @transform_4, window_bounds = array<i64: 1, 8, 16, 128>}]} {
    %c0 = arith.constant 0 : index
    %c0_0 = arith.constant 0 : index
    %c0_1 = arith.constant 0 : index
    %0 = vector.load %arg2[%c0, %c0_0, %c0_1] : memref<1x8x256xbf16, #tpu.memory_space<vmem>>, vector<1x8x256xbf16>
    %1 = vector.shape_cast %0 : vector<1x8x256xbf16> to vector<8x256xbf16>
    %2 = arith.extf %1 : vector<8x256xbf16> to vector<8x256xf32>
    %c0_2 = arith.constant 0 : index
    %c0_3 = arith.constant 0 : index
    %c0_4 = arith.constant 0 : index
    %3 = vector.load %arg3[%c0_2, %c0_3, %c0_4] : memref<1x16x256xbf16, #tpu.memory_space<vmem>>, vector<1x16x256xbf16>
    %4 = vector.shape_cast %3 : vector<1x16x256xbf16> to vector<16x256xbf16>
    %5 = arith.extf %4 : vector<16x256xbf16> to vector<16x256xf32>
    %6 = vector.extract_strided_slice %2 {offsets = [0, 0], sizes = [8, 128], strides = [1, 1]} : vector<8x256xf32> to vector<8x128xf32>
    %7 = vector.shape_cast %6 : vector<8x128xf32> to vector<8x1x128xf32>
    %8 = vector.extract_strided_slice %5 {offsets = [0, 0], sizes = [16, 128], strides = [1, 1]} : vector<16x256xf32> to vector<16x128xf32>
    %9 = vector.shape_cast %8 : vector<16x128xf32> to vector<1x16x128xf32>
    %10 = vector.broadcast %7 : vector<8x1x128xf32> to vector<8x16x128xf32>
    %11 = vector.broadcast %9 : vector<1x16x128xf32> to vector<8x16x128xf32>
    %12 = arith.addf %10, %11 : vector<8x16x128xf32>
    %13 = vector.extract_strided_slice %2 {offsets = [0, 128], sizes = [8, 128], strides = [1, 1]} : vector<8x256xf32> to vector<8x128xf32>
    %14 = vector.shape_cast %13 : vector<8x128xf32> to vector<8x1x128xf32>
    %15 = vector.extract_strided_slice %5 {offsets = [0, 128], sizes = [16, 128], strides = [1, 1]} : vector<16x256xf32> to vector<16x128xf32>
    %16 = vector.shape_cast %15 : vector<16x128xf32> to vector<1x16x128xf32>
    %17 = vector.broadcast %14 : vector<8x1x128xf32> to vector<8x16x128xf32>
    %18 = vector.broadcast %16 : vector<1x16x128xf32> to vector<8x16x128xf32>
    %19 = arith.addf %17, %18 : vector<8x16x128xf32>
    %20 = math.tanh %12 : vector<8x16x128xf32>
    %21 = arith.negf %19 : vector<8x16x128xf32>
    %22 = math.exp %21 : vector<8x16x128xf32>
    %cst = arith.constant 1.000000e+00 : f32
    %23 = vector.broadcast %cst : f32 to vector<8x16x128xf32>
    %24 = arith.addf %23, %22 : vector<8x16x128xf32>
    %25 = arith.divf %23, %24 : vector<8x16x128xf32>
    %26 = arith.mulf %20, %25 : vector<8x16x128xf32>
    %27 = arith.truncf %26 : vector<8x16x128xf32> to vector<8x16x128xbf16>
    %28 = vector.shape_cast %27 : vector<8x16x128xbf16> to vector<128x128xbf16>
    %c0_5 = arith.constant 0 : index
    %c0_6 = arith.constant 0 : index
    %29 = vector.load %arg4[%c0_5, %c0_6] : memref<128x128xbf16, #tpu.memory_space<vmem>>, vector<128x128xbf16>
    %cst_7 = arith.constant dense<0.000000e+00> : vector<128x128xf32>
    %30 = tpu.matmul %28, %29, %cst_7 {dimension_numbers = #tpu.dot_dimension_numbers<[1], [0], [0], [1], [0, 0, 1, 1], [], []>} : vector<128x128xbf16>, vector<128x128xbf16>, vector<128x128xf32> -> vector<128x128xf32>
    %c0_8 = arith.constant 0 : index
    %c0_9 = arith.constant 0 : index
    %31 = vector.load %arg5[%c0_8, %c0_9] : memref<1x128xf32, #tpu.memory_space<vmem>>, vector<1x128xf32>
    %32 = vector.broadcast %31 : vector<1x128xf32> to vector<128x128xf32>
    %33 = arith.addf %30, %32 : vector<128x128xf32>
    %cst_10 = arith.constant dense<0xFF800000> : vector<128xf32>
    %34 = vector.multi_reduction <maximumf>, %33, %cst_10 [1] : vector<128x128xf32> to vector<128xf32>
    %35 = vector.shape_cast %34 : vector<128xf32> to vector<128x1xf32>
    %36 = vector.broadcast %35 : vector<128x1xf32> to vector<128x128xf32>
    %37 = arith.subf %33, %36 : vector<128x128xf32>
    %38 = math.exp %37 : vector<128x128xf32>
    %cst_11 = arith.constant dense<0.000000e+00> : vector<128xf32>
    %39 = vector.multi_reduction <add>, %38, %cst_11 [1] : vector<128x128xf32> to vector<128xf32>
    %40 = vector.shape_cast %39 : vector<128xf32> to vector<128x1xf32>
    %41 = math.log %40 : vector<128x1xf32>
    %42 = vector.broadcast %41 : vector<128x1xf32> to vector<128x128xf32>
    %43 = arith.subf %37, %42 : vector<128x128xf32>
    %44 = vector.shape_cast %43 : vector<128x128xf32> to vector<1x8x16x128xf32>
    %c0_12 = arith.constant 0 : index
    %c0_13 = arith.constant 0 : index
    %c0_14 = arith.constant 0 : index
    %c0_15 = arith.constant 0 : index
    %45 = vector.load %arg6[%c0_12, %c0_13, %c0_14, %c0_15] : memref<1x8x16x128xf32, #tpu.memory_space<vmem>>, vector<1x8x16x128xf32>
    tpu.vector_store %arg6[%c0_12, %c0_13, %c0_14, %c0_15], %44 {strides = array<i32>} : memref<1x8x16x128xf32, #tpu.memory_space<vmem>>, vector<1x8x16x128xf32>,
    return
  }
  func.func @transform_0(%arg0: i32, %arg1: i32) -> (i32, i32, i32) {
    %c0_i32 = arith.constant 0 : i32
    %c0_i32_0 = arith.constant 0 : i32
    return %arg0, %arg1, %c0_i32 : i32, i32, i32
  }
  func.func @transform_1(%arg0: i32, %arg1: i32) -> (i32, i32, i32) {
    %c0_i32 = arith.constant 0 : i32
    %c0_i32_0 = arith.constant 0 : i32
    %c0_i32_1 = arith.constant 0 : i32
    return %arg0, %c0_i32, %c0_i32_0 : i32, i32, i32
  }
  func.func @transform_2(%arg0: i32, %arg1: i32) -> (i32, i32) {
    %c0_i32 = arith.constant 0 : i32
    %c0_i32_0 = arith.constant 0 : i32
    %c0_i32_1 = arith.constant 0 : i32
    return %c0_i32, %c0_i32_0 : i32, i32
  }
  func.func @transform_3(%arg0: i32, %arg1: i32) -> (i32, i32) {
    %c0_i32 = arith.constant 0 : i32
    %c0_i32_0 = arith.constant 0 : i32
    %c0_i32_1 = arith.constant 0 : i32
    return %c0_i32, %c0_i32_0 : i32, i32
  }
  func.func @transform_4(%arg0: i32, %arg1: i32) -> (i32, i32, i32, i32) {
    %c0_i32 = arith.constant 0 : i32
    %c0_i32_0 = arith.constant 0 : i32
    %c0_i32_1 = arith.constant 0 : i32
    return %arg0, %arg1, %c0_i32, %c0_i32_0 : i32, i32, i32, i32
  }
}

</mosaic_0001>

<llo_original>
// kernel: tpu_custom_call.1
$region0: #{tpu_custom_call.1}
  #allocation0 [shape = 'u32[]', space=smem, size = 0x4, offset = 0x4, fixed_abs, tag = 'smem constant byte address 0x4 - core index']
  #allocation1 [shape = 'u32[144,128]{1,0:T(1,128)}', space=vmem, size = 0x12000, scoped, tag = 'internal scratch']
  %s0 = inlined_call_operand.hbm [shape: bf16[2,8,256], index: 0, kind: input, shape index: {}]
  %s1 = inlined_call_operand.hbm [shape: bf16[2,16,256], index: 1, kind: input, shape index: {}]
  %s2 = inlined_call_operand.hbm [shape: bf16[128,128], index: 2, kind: input, shape index: {}]
  %s3 = inlined_call_operand.hbm [shape: f32[1,128], index: 3, kind: input, shape index: {}]
  %s4 = inlined_call_operand.hbm [shape: f32[2,8,16,128], index: 4, kind: output, shape index: {}]
  %s5 = sld [smem:[#allocation0]]
  $region65: #{tpu_custom_call.1} parent=0
    _
  %s7 = ssub.s32 1, %s5
  %s8 = scalar_select 0, %s7, %s5
  $region1: #{tpu_custom_call.1} parent=0
    #allocation2 [shape = 'u8[8192]{0}', space=vmem, size = 0x2000, scoped, tag = 'input window, operand 0']
    #allocation3 [shape = 's32[2]{0}', space=sflag, size = 0x8, scoped, tag = 'scoped memory for tpu_custom_call.1']
    #allocation4 [shape = 's32[2]{0}', space=sflag, size = 0x8, scoped, tag = 'scoped memory for tpu_custom_call.1']
    #allocation5 [shape = 'u8[16384]{0}', space=vmem, size = 0x4000, scoped, tag = 'input window, operand 1']
    #allocation6 [shape = 's32[2]{0}', space=sflag, size = 0x8, scoped, tag = 'scoped memory for tpu_custom_call.1']
    #allocation7 [shape = 'u8[32768]{0}', space=vmem, size = 0x8000, scoped, tag = 'input window, operand 2, single buffered']
    #allocation8 [shape = 'u8[512]{0}', space=vmem, size = 0x400, scoped, tag = 'input window, operand 3, single buffered']
    #allocation9 [shape = 's32[1]{0}', space=sflag, size = 0x4, scoped, tag = 'scoped memory for tpu_custom_call.1']
    #allocation10 [shape = 'u8[131072]{0}', space=vmem, size = 0x20000, scoped, tag = 'output window, operand 0']
    %9 = vsyncpa [#allocation3], 0
    %s10 = scalar_lea.sflag [#allocation3], 1
    %11 = vsyncpa %s10, 0
    %12 = vsyncpa [#allocation6], 0
    %s13 = scalar_lea.sflag [#allocation6], 1
    %14 = vsyncpa %s13, 0
    %15 = vsyncpa [#allocation9], 0
    %16 = vsyncpa [#allocation4], 0
    %s17 = scalar_lea.sflag [#allocation4], 1
    %18 = vsyncpa %s17, 0
    loop: start=0, step=1, limit=4
    $region2: #{tpu_custom_call.1} parent=1 // loop_pre_header
      _
    $region3: #{tpu_custom_call.1} parent=1 // loop_header
      %s20 = sphi 0, %s24
      %p21 = scmp.ge.s32.totalorder %s20, 4
      %s27 = sphi 0, %s39
      %s28 = sphi 0, %s35
      %s29 = sphi 0, %s27
      %s30 = sphi 0, %s28
      %s31 = sphi 0, %s29
      %s32 = sphi 0, %s30
      %s44 = sphi 0, %s46
      %s47 = sphi 0, %s44
      %s48 = sphi 0, %s47
      %s64 = sphi 0, %s48
      %s70 = sphi 0, %s72
      %s73 = sphi 0, %s70
      %s74 = sphi 0, %s73
      %s90 = sphi 0, %s74
      %s94 = sphi 0, %s94
      %s96 = sphi 0, %s94
      %s97 = sphi 0, %s96
      %s111 = sphi 0, %s97
      %s115 = sphi 0, %s115
      %s117 = sphi 0, %s115
      %s118 = sphi 0, %s117
      %s132 = sphi 0, %s118
      %s140 = sphi 0, %s142
      %s143 = sphi 0, %s140
      %s144 = sphi 0, %s143
      %s160 = sphi 0, %s144
    $region4: #{tpu_custom_call.1} parent=1 // loop_header_branch
      %23 = sbr.rel (%p21) target = $region8
    $region5: #{tpu_custom_call.1} parent=1 // loop_body
      %s25 = ssub.s32 %s20, 1
      %s26 = ssub.s32 %s20, 2
      %s33 = sadd.s32 1, %s28
      %p34 = scmp.ge.s32.totalorder %s33, 1
      %s35 = scalar_select %p34, 0, %s33
      %s36 = sadd.s32 1, %s27
      %s37 = scalar_select %p34, %s36, %s27
      %p38 = scmp.ge.s32.totalorder %s37, 2
      %s39 = scalar_select %p38, 0, %s37
      %s40 = ssub.s32 %s27, %s39
      %s41 = ssub.s32 %s28, %s35
      %s42 = sor.u32 %s40, %s41
      %p43 = scmp.eq.s32.totalorder %s42, 0
      %s45 = sadd.s32 %s44, 1
      %s46 = scalar_select %p43, %s44, %s45
      %p49 = pneg %p43
      %p50 = scmp.eq.s32.totalorder %s20, 1
      %p51 = por %p49, %p50
      %p52 = scmp.ne.s32.totalorder %s44, %s47
      %p53 = scmp.eq.s32.totalorder %s20, 0
      %p54 = por %p52, %p53
      %p55 = scmp.ne.s32.totalorder %s44, %s47
      %p56 = scmp.eq.s32.totalorder %s25, 1
      %p57 = por %p55, %p56
      %p58 = scmp.ne.s32.totalorder %s47, %s48
      %p59 = scmp.eq.s32.totalorder %s25, 0
      %p60 = por %p58, %p59
      %p61 = scmp.ne.s32.totalorder %s47, %s48
      %p62 = scmp.eq.s32.totalorder %s26, 1
      %p63 = por %p61, %p62
      %p65 = scmp.ne.s32.totalorder %s48, %s64
      %p66 = scmp.eq.s32.totalorder %s26, 0
      %p67 = por %p65, %p66
      %s68 = ssub.s32 %s27, %s39
      %p69 = scmp.eq.s32.totalorder %s68, 0
      %s71 = sadd.s32 %s70, 1
      %s72 = scalar_select %p69, %s70, %s71
      %p75 = pneg %p69
      %p76 = scmp.eq.s32.totalorder %s20, 1
      %p77 = por %p75, %p76
      %p78 = scmp.ne.s32.totalorder %s70, %s73
      %p79 = scmp.eq.s32.totalorder %s20, 0
      %p80 = por %p78, %p79
      %p81 = scmp.ne.s32.totalorder %s70, %s73
      %p82 = scmp.eq.s32.totalorder %s25, 1
      %p83 = por %p81, %p82
      %p84 = scmp.ne.s32.totalorder %s73, %s74
      %p85 = scmp.eq.s32.totalorder %s25, 0
      %p86 = por %p84, %p85
      %p87 = scmp.ne.s32.totalorder %s73, %s74
      %p88 = scmp.eq.s32.totalorder %s26, 1
      %p89 = por %p87, %p88
      %p91 = scmp.ne.s32.totalorder %s74, %s90
      %p92 = scmp.eq.s32.totalorder %s26, 0
      %p93 = por %p91, %p92
      %s95 = sadd.s32 %s94, 1
      %p98 = scmp.eq.s32.totalorder %s20, 1
      %p99 = scmp.ne.s32.totalorder %s94, %s96
      %p100 = scmp.eq.s32.totalorder %s20, 0
      %p101 = por %p99, %p100
      %p102 = scmp.ne.s32.totalorder %s94, %s96
      %p103 = scmp.eq.s32.totalorder %s25, 1
      %p104 = por %p102, %p103
      %p105 = scmp.ne.s32.totalorder %s96, %s97
      %p106 = scmp.eq.s32.totalorder %s25, 0
      %p107 = por %p105, %p106
      %p108 = scmp.ne.s32.totalorder %s96, %s97
      %p109 = scmp.eq.s32.totalorder %s26, 1
      %p110 = por %p108, %p109
      %p112 = scmp.ne.s32.totalorder %s97, %s111
      %p113 = scmp.eq.s32.totalorder %s26, 0
      %p114 = por %p112, %p113
      %s116 = sadd.s32 %s115, 1
      %p119 = scmp.eq.s32.totalorder %s20, 1
      %p120 = scmp.ne.s32.totalorder %s115, %s117
      %p121 = scmp.eq.s32.totalorder %s20, 0
      %p122 = por %p120, %p121
      %p123 = scmp.ne.s32.totalorder %s115, %s117
      %p124 = scmp.eq.s32.totalorder %s25, 1
      %p125 = por %p123, %p124
      %p126 = scmp.ne.s32.totalorder %s117, %s118
      %p127 = scmp.eq.s32.totalorder %s25, 0
      %p128 = por %p126, %p127
      %p129 = scmp.ne.s32.totalorder %s117, %s118
      %p130 = scmp.eq.s32.totalorder %s26, 1
      %p131 = por %p129, %p130
      %p133 = scmp.ne.s32.totalorder %s118, %s132
      %p134 = scmp.eq.s32.totalorder %s26, 0
      %p135 = por %p133, %p134
      %s136 = ssub.s32 %s27, %s39
      %s137 = ssub.s32 %s28, %s35
      %s138 = sor.u32 %s136, %s137
      %p139 = scmp.eq.s32.totalorder %s138, 0
      %s141 = sadd.s32 %s140, 1
      %s142 = scalar_select %p139, %s140, %s141
      %p145 = pneg %p139
      %p146 = scmp.eq.s32.totalorder %s20, 1
      %p147 = por %p145, %p146
      %p148 = scmp.ne.s32.totalorder %s140, %s143
      %p149 = scmp.eq.s32.totalorder %s20, 0
      %p150 = por %p148, %p149
      %p151 = scmp.ne.s32.totalorder %s140, %s143
      %p152 = scmp.eq.s32.totalorder %s25, 1
      %p153 = por %p151, %p152
      %p154 = scmp.ne.s32.totalorder %s143, %s144
      %p155 = scmp.eq.s32.totalorder %s25, 0
      %p156 = por %p154, %p155
      %p157 = scmp.ne.s32.totalorder %s143, %s144
      %p158 = scmp.eq.s32.totalorder %s26, 1
      %p159 = por %p157, %p158
      %p161 = scmp.ne.s32.totalorder %s144, %s160
      %p162 = scmp.eq.s32.totalorder %s26, 0
      %p163 = por %p161, %p162
      %p164 = scmp.le.s32.totalorder 1, %s20
      %p165 = scmp.lt.s32.totalorder %s20, 3
      %p166 = pnand %p164, %p165
      %p167 = pneg %p166
      // Predicated region
      $region9: #{tpu_custom_call.1} parent=5 // pred_check
        _
      $region10: #{tpu_custom_call.1} parent=5 // pred_check_branch
        %169 = sbr.rel (%p166) target = $region12
      $region11: #{tpu_custom_call.1} parent=5 // pred_region
        %s170 = ssub.s32 %s20, 1
        // Predicated region
        $region13: #{tpu_custom_call.1} parent=11 // pred_check
          %p171 = pneg %p107
        $region14: #{tpu_custom_call.1} parent=11 // pred_check_branch
          %173 = sbr.rel (%p171) target = $region16
        $region15: #{tpu_custom_call.1} parent=11 // pred_region
          %s175 = ssub.s32 1024, 1024
          %176 = vsyncadd [#allocation6], %s175
          %s177 = sshll.u32 [#allocation7], 4
          %s178 = int_to_ptr.vmem [resolvable:$true] %s177
          %183 = dma.hbm_to_vmem [thread:$0]  %s2, 1024, %s178, [#allocation6], 64, 64, 4
        $region16: #{tpu_custom_call.1} parent=11 // pred_fallthru
          _
        // Predicated region
        $region17: #{tpu_custom_call.1} parent=11 // pred_check
          %p184 = pneg %p128
        $region18: #{tpu_custom_call.1} parent=11 // pred_check_branch
          %186 = sbr.rel (%p184) target = $region20
        $region19: #{tpu_custom_call.1} parent=11 // pred_region
          %s188 = ssub.s32 16, 16
          %189 = vsyncadd [#allocation9], %s188
          %s191 = sshll.u32 [#allocation8], 4
          %s192 = int_to_ptr.vmem [resolvable:$true] %s191
          %194 = dma.hbm_to_vmem [thread:$0]  %s3, 16, %s192, [#allocation9]
        $region20: #{tpu_custom_call.1} parent=11 // pred_fallthru
          _
      $region12: #{tpu_custom_call.1} parent=5 // pred_fallthru
        _
      %p195 = scmp.lt.s32.totalorder %s20, 2
      // Predicated region
      $region21: #{tpu_custom_call.1} parent=5 // pred_check
        %p196 = pneg %p195
      $region22: #{tpu_custom_call.1} parent=5 // pred_check_branch
        %198 = sbr.rel (%p196) target = $region24
      $region23: #{tpu_custom_call.1} parent=5 // pred_region
        // Predicated region
        $region25: #{tpu_custom_call.1} parent=23 // pred_check
          %p199 = pneg %p54
        $region26: #{tpu_custom_call.1} parent=23 // pred_check_branch
          %201 = sbr.rel (%p199) target = $region28
        $region27: #{tpu_custom_call.1} parent=23 // pred_region
          %s202 = sand.u32 %s44, 1
          %s203 = scalar_lea.sflag [#allocation3], %s202
          %s204 = sand.u32 %s44, 1
          %s205 = smul.addr %s204, 8
          %s206 = scalar_lea.vmem [#allocation2], %s205
          %s208 = ssub.s32 128, 128
          %209 = vsyncadd %s203, %s208
          %s210 = smul.addr %s28, 2
          %s211 = smul.addr %s27, 2
          %s212 = sadd.s32 %s210, %s211
          %s213 = smul.addr %s212, 64
          %s214 = scalar_lea.hbm %s0, %s213
          %s216 = sshll.u32 %s206, 4
          %s217 = int_to_ptr.vmem [resolvable:$true] %s216
          %219 = dma.hbm_to_vmem [thread:$0]  %s214, 128, %s217, %s203
        $region28: #{tpu_custom_call.1} parent=23 // pred_fallthru
          _
        // Predicated region
        $region29: #{tpu_custom_call.1} parent=23 // pred_check
          %p220 = pneg %p80
        $region30: #{tpu_custom_call.1} parent=23 // pred_check_branch
          %222 = sbr.rel (%p220) target = $region32
        $region31: #{tpu_custom_call.1} parent=23 // pred_region
          %s223 = sand.u32 %s20, 1
          %s224 = scalar_lea.sflag [#allocation6], %s223
          %s225 = sand.u32 %s70, 1
          %s226 = smul.addr %s225, 16
          %s227 = scalar_lea.vmem [#allocation5], %s226
          %s229 = ssub.s32 256, 256
          %230 = vsyncadd %s224, %s229
          %s231 = smul.addr %s27, 4
          %s232 = smul.addr %s231, 64
          %s233 = scalar_lea.hbm %s1, %s232
          %s234 = sshll.u32 %s227, 4
          %s235 = int_to_ptr.vmem [resolvable:$true] %s234
          %240 = dma.hbm_to_vmem [thread:$0]  %s233, 256, %s235, %s224, 128, 128, 8
        $region32: #{tpu_custom_call.1} parent=23 // pred_fallthru
          _
      $region24: #{tpu_custom_call.1} parent=5 // pred_fallthru
        _
      %p241 = scmp.le.s32.totalorder 1, %s20
      %p242 = scmp.lt.s32.totalorder %s20, 3
      %p243 = pnand %p241, %p242
      %p244 = pneg %p243
      // Predicated region
      $region33: #{tpu_custom_call.1} parent=5 // pred_check
        _
      $region34: #{tpu_custom_call.1} parent=5 // pred_check_branch
        %246 = sbr.rel (%p243) target = $region36
      $region35: #{tpu_custom_call.1} parent=5 // pred_region
        %s247 = ssub.s32 %s20, 1
        %s248 = sand.u32 %s47, 1
        %s249 = scalar_lea.sflag [#allocation3], %s248
        %s250 = sand.u32 %s47, 1
        %s251 = smul.addr %s250, 8
        %s252 = scalar_lea.vmem [#allocation2], %s251
        // Predicated region
        $region37: #{tpu_custom_call.1} parent=35 // pred_check
          %p253 = pneg %p60
        $region38: #{tpu_custom_call.1} parent=35 // pred_check_branch
          %255 = sbr.rel (%p253) target = $region40
        $region39: #{tpu_custom_call.1} parent=35 // pred_region
          %256 = dma.done %s249, 128
        $region40: #{tpu_custom_call.1} parent=35 // pred_fallthru
          _
        %s257 = sand.u32 %s25, 1
        %s258 = scalar_lea.sflag [#allocation6], %s257
        %s259 = sand.u32 %s73, 1
        %s260 = smul.addr %s259, 16
        %s261 = scalar_lea.vmem [#allocation5], %s260
        // Predicated region
        $region41: #{tpu_custom_call.1} parent=35 // pred_check
          %p262 = pneg %p86
        $region42: #{tpu_custom_call.1} parent=35 // pred_check_branch
          %264 = sbr.rel (%p262) target = $region44
        $region43: #{tpu_custom_call.1} parent=35 // pred_region
          %265 = dma.done %s258, 256
        $region44: #{tpu_custom_call.1} parent=35 // pred_fallthru
          _
        // Predicated region
        $region45: #{tpu_custom_call.1} parent=35 // pred_check
          %p266 = pneg %p107
        $region46: #{tpu_custom_call.1} parent=35 // pred_check_branch
          %268 = sbr.rel (%p266) target = $region48
        $region47: #{tpu_custom_call.1} parent=35 // pred_region
          %269 = dma.done [#allocation6], 1024
        $region48: #{tpu_custom_call.1} parent=35 // pred_fallthru
          _
        // Predicated region
        $region49: #{tpu_custom_call.1} parent=35 // pred_check
          %p270 = pneg %p128
        $region50: #{tpu_custom_call.1} parent=35 // pred_check_branch
          %272 = sbr.rel (%p270) target = $region52
        $region51: #{tpu_custom_call.1} parent=35 // pred_region
          %273 = dma.done [#allocation9], 16
        $region52: #{tpu_custom_call.1} parent=35 // pred_fallthru
          _
        %s274 = sand.u32 %s47, 1
        %s275 = scalar_lea.sflag [#allocation3], %s274
        %s276 = sand.u32 %s47, 1
        %s277 = smul.addr %s276, 8
        %s278 = scalar_lea.vmem [#allocation2], %s277
        %p279 = pneg %p60
        %p280 = pneg %p57
        %s281 = sand.u32 %s25, 1
        %s282 = scalar_lea.sflag [#allocation6], %s281
        %s283 = sand.u32 %s73, 1
        %s284 = smul.addr %s283, 16
        %s285 = scalar_lea.vmem [#allocation5], %s284
        %p286 = pneg %p86
        %p287 = pneg %p83
        %p288 = pneg %p107
        %p289 = pneg %p104
        %p290 = pneg %p128
        %p291 = pneg %p125
        %p292 = pneg %p156
        %p293 = pneg %p153
        %s294 = sand.u32 %s143, 1
        %s295 = scalar_lea.sflag [#allocation4], %s294
        %s296 = sand.u32 %s143, 1
        %s297 = smul.addr %s296, 128
        %s298 = scalar_lea.vmem [#allocation10], %s297
        %s299 = smul.u32 8, %s30
        %v301 = vld [vmem:[%s252] sm:$0xff]
        %v302 = vunpack.c.l.bf16 %v301
        %v303 = vunpack.c.h.bf16 %v301
        %v304 = vld [vmem:[%s261] sm:$0xff]
        %v305 = vld [vmem:[%s261 + $0x8] sm:$0xff]
        %v306 = vunpack.c.l.bf16 %v304
        %v307 = vunpack.c.h.bf16 %v304
        %v308 = vunpack.c.l.bf16 %v305
        %v309 = vunpack.c.h.bf16 %v305
        %v311 = vcombine.high %v302, %v302
        %v313 = vunpack.c.l.s4 1966171168
        %v314 = vunpack.c.0.s8 %v313
        %v315 = vlaneseq
        %v316 = vshrl.u32 %v315, 7
        %v317 = vsub.s32 %v314, %v316
        %v318 = vrot.slane %v302, %v317
        %v320 = vunpack.c.l.s4 1966171168
        %v321 = vunpack.c.0.s8 %v320
        %v322 = vlaneseq
        %v323 = vshrl.u32 %v322, 7
        %v324 = vsub.s32 %v321, %v323
        %v325 = vrot.slane %v311, %v324
        %v326 = vcombine.high %v318, %v318
        %v327 = vcombine.high %v325, %v325
        %v329 = vunpack.c.l.s4 1966171168
        %v330 = vunpack.c.0.s8 %v329
        %v331 = vlaneseq
        %v332 = vshrl.u32 %v331, 7
        %v333 = vsub.s32 %v330, %v332
        %v334 = vrot.slane %v318, %v333
        %v336 = vunpack.c.l.s4 1966171168
        %v337 = vunpack.c.0.s8 %v336
        %v338 = vlaneseq
        %v339 = vshrl.u32 %v338, 7
        %v340 = vsub.s32 %v337, %v339
        %v341 = vrot.slane %v325, %v340
        %v343 = vunpack.c.l.s4 1966171168
        %v344 = vunpack.c.0.s8 %v343
        %v345 = vlaneseq
        %v346 = vshrl.u32 %v345, 7
        %v347 = vsub.s32 %v344, %v346
        %v348 = vrot.slane %v326, %v347
        %v350 = vunpack.c.l.s4 1966171168
        %v351 = vunpack.c.0.s8 %v350
        %v352 = vlaneseq
        %v353 = vshrl.u32 %v352, 7
        %v354 = vsub.s32 %v351, %v353
        %v355 = vrot.slane %v327, %v354
        %v356 = vcombine.high %v334, %v334
        %v357 = vcombine.high %v341, %v341
        %v358 = vcombine.high %v348, %v348
        %v359 = vcombine.high %v355, %v355
        %v360 = vlaneseq
        %v361 = vshrl.u32 %v360, 7
        %v362 = vsub.s32 0, %v361
        %v363 = vrot.slane %v334, %v362
        %v364 = vlaneseq
        %v365 = vshrl.u32 %v364, 7
        %v366 = vsub.s32 0, %v365
        %v367 = vrot.slane %v348, %v366
        %v368 = vlaneseq
        %v369 = vshrl.u32 %v368, 7
        %v370 = vsub.s32 0, %v369
        %v371 = vrot.slane %v356, %v370
        %v372 = vlaneseq
        %v373 = vshrl.u32 %v372, 7
        %v374 = vsub.s32 0, %v373
        %v375 = vrot.slane %v358, %v374
        %v376 = vlaneseq
        %v377 = vshrl.u32 %v376, 7
        %v378 = vsub.s32 0, %v377
        %v379 = vrot.slane %v341, %v378
        %v380 = vlaneseq
        %v381 = vshrl.u32 %v380, 7
        %v382 = vsub.s32 0, %v381
        %v383 = vrot.slane %v355, %v382
        %v384 = vlaneseq
        %v385 = vshrl.u32 %v384, 7
        %v386 = vsub.s32 0, %v385
        %v387 = vrot.slane %v357, %v386
        %v388 = vlaneseq
        %v389 = vshrl.u32 %v388, 7
        %v390 = vsub.s32 0, %v389
        %v391 = vrot.slane %v359, %v390
        %v400 = vadd.f32 %v363, %v306
        %v401 = vadd.f32 %v363, %v308
        %v402 = vadd.f32 %v367, %v306
        %v403 = vadd.f32 %v367, %v308
        %v404 = vadd.f32 %v371, %v306
        %v405 = vadd.f32 %v371, %v308
        %v406 = vadd.f32 %v375, %v306
        %v407 = vadd.f32 %v375, %v308
        %v408 = vadd.f32 %v379, %v306
        %v409 = vadd.f32 %v379, %v308
        %v410 = vadd.f32 %v383, %v306
        %v411 = vadd.f32 %v383, %v308
        %v412 = vadd.f32 %v387, %v306
        %v413 = vadd.f32 %v387, %v308
        %v414 = vadd.f32 %v391, %v306
        %v415 = vadd.f32 %v391, %v308
        %v417 = vcombine.high %v303, %v303
        %v419 = vunpack.c.l.s4 1966171168
        %v420 = vunpack.c.0.s8 %v419
        %v421 = vlaneseq
        %v422 = vshrl.u32 %v421, 7
        %v423 = vsub.s32 %v420, %v422
        %v424 = vrot.slane %v303, %v423
        %v426 = vunpack.c.l.s4 1966171168
        %v427 = vunpack.c.0.s8 %v426
        %v428 = vlaneseq
        %v429 = vshrl.u32 %v428, 7
        %v430 = vsub.s32 %v427, %v429
        %v431 = vrot.slane %v417, %v430
        %v432 = vcombine.high %v424, %v424
        %v433 = vcombine.high %v431, %v431
        %v435 = vunpack.c.l.s4 1966171168
        %v436 = vunpack.c.0.s8 %v435
        %v437 = vlaneseq
        %v438 = vshrl.u32 %v437, 7
        %v439 = vsub.s32 %v436, %v438
        %v440 = vrot.slane %v424, %v439
        %v442 = vunpack.c.l.s4 1966171168
        %v443 = vunpack.c.0.s8 %v442
        %v444 = vlaneseq
        %v445 = vshrl.u32 %v444, 7
        %v446 = vsub.s32 %v443, %v445
        %v447 = vrot.slane %v431, %v446
        %v449 = vunpack.c.l.s4 1966171168
        %v450 = vunpack.c.0.s8 %v449
        %v451 = vlaneseq
        %v452 = vshrl.u32 %v451, 7
        %v453 = vsub.s32 %v450, %v452
        %v454 = vrot.slane %v432, %v453
        %v456 = vunpack.c.l.s4 1966171168
        %v457 = vunpack.c.0.s8 %v456
        %v458 = vlaneseq
        %v459 = vshrl.u32 %v458, 7
        %v460 = vsub.s32 %v457, %v459
        %v461 = vrot.slane %v433, %v460
        %v462 = vcombine.high %v440, %v440
        %v463 = vcombine.high %v447, %v447
        %v464 = vcombine.high %v454, %v454
        %v465 = vcombine.high %v461, %v461
        %v466 = vlaneseq
        %v467 = vshrl.u32 %v466, 7
        %v468 = vsub.s32 0, %v467
        %v469 = vrot.slane %v440, %v468
        %v470 = vlaneseq
        %v471 = vshrl.u32 %v470, 7
        %v472 = vsub.s32 0, %v471
        %v473 = vrot.slane %v454, %v472
        %v474 = vlaneseq
        %v475 = vshrl.u32 %v474, 7
        %v476 = vsub.s32 0, %v475
        %v477 = vrot.slane %v462, %v476
        %v478 = vlaneseq
        %v479 = vshrl.u32 %v478, 7
        %v480 = vsub.s32 0, %v479
        %v481 = vrot.slane %v464, %v480
        %v482 = vlaneseq
        %v483 = vshrl.u32 %v482, 7
        %v484 = vsub.s32 0, %v483
        %v485 = vrot.slane %v447, %v484
        %v486 = vlaneseq
        %v487 = vshrl.u32 %v486, 7
        %v488 = vsub.s32 0, %v487
        %v489 = vrot.slane %v461, %v488
        %v490 = vlaneseq
        %v491 = vshrl.u32 %v490, 7
        %v492 = vsub.s32 0, %v491
        %v493 = vrot.slane %v463, %v492
        %v494 = vlaneseq
        %v495 = vshrl.u32 %v494, 7
        %v496 = vsub.s32 0, %v495
        %v497 = vrot.slane %v465, %v496
        %v506 = vadd.f32 %v469, %v307
        %v507 = vadd.f32 %v469, %v309
        %v508 = vadd.f32 %v473, %v307
        %v509 = vadd.f32 %v473, %v309
        %v510 = vadd.f32 %v477, %v307
        %v511 = vadd.f32 %v477, %v309
        %v512 = vadd.f32 %v481, %v307
        %v513 = vadd.f32 %v481, %v309
        %v514 = vadd.f32 %v485, %v307
        %v515 = vadd.f32 %v485, %v309
        %v516 = vadd.f32 %v489, %v307
        %v517 = vadd.f32 %v489, %v309
        %v518 = vadd.f32 %v493, %v307
        %v519 = vadd.f32 %v493, %v309
        %v520 = vadd.f32 %v497, %v307
        %v521 = vadd.f32 %v497, %v309
        %v522 = vtanh.pop %v400
        %v523 = vtanh.pop %v401
        %v524 = vtanh.pop %v402
        %v525 = vtanh.pop %v403
        %v526 = vtanh.pop %v404
        %v527 = vtanh.pop %v405
        %v528 = vtanh.pop %v406
        %v529 = vtanh.pop %v407
        %v530 = vtanh.pop %v408
        %v531 = vtanh.pop %v409
        %v532 = vtanh.pop %v410
        %v533 = vtanh.pop %v411
        %v534 = vtanh.pop %v412
        %v535 = vtanh.pop %v413
        %v536 = vtanh.pop %v414
        %v537 = vtanh.pop %v415
        %v538 = vxor.u32 %v506, 2147483648
        %v539 = vxor.u32 %v507, 2147483648
        %v540 = vxor.u32 %v508, 2147483648
        %v541 = vxor.u32 %v509, 2147483648
        %v542 = vxor.u32 %v510, 2147483648
        %v543 = vxor.u32 %v511, 2147483648
        %v544 = vxor.u32 %v512, 2147483648
        %v545 = vxor.u32 %v513, 2147483648
        %v546 = vxor.u32 %v514, 2147483648
        %v547 = vxor.u32 %v515, 2147483648
        %v548 = vxor.u32 %v516, 2147483648
        %v549 = vxor.u32 %v517, 2147483648
        %v550 = vxor.u32 %v518, 2147483648
        %v551 = vxor.u32 %v519, 2147483648
        %v552 = vxor.u32 %v520, 2147483648
        %v553 = vxor.u32 %v521, 2147483648
        %v554 = vmul.f32 %v538, 1.442695
        %v555 = vpow.pop %v554
        %v556 = vmul.f32 %v539, 1.442695
        %v557 = vpow.pop %v556
        %v558 = vmul.f32 %v540, 1.442695
        %v559 = vpow.pop %v558
        %v560 = vmul.f32 %v541, 1.442695
        %v561 = vpow.pop %v560
        %v562 = vmul.f32 %v542, 1.442695
        %v563 = vpow.pop %v562
        %v564 = vmul.f32 %v543, 1.442695
        %v565 = vpow.pop %v564
        %v566 = vmul.f32 %v544, 1.442695
        %v567 = vpow.pop %v566
        %v568 = vmul.f32 %v545, 1.442695
        %v569 = vpow.pop %v568
        %v570 = vmul.f32 %v546, 1.442695
        %v571 = vpow.pop %v570
        %v572 = vmul.f32 %v547, 1.442695
        %v573 = vpow.pop %v572
        %v574 = vmul.f32 %v548, 1.442695
        %v575 = vpow.pop %v574
        %v576 = vmul.f32 %v549, 1.442695
        %v577 = vpow.pop %v576
        %v578 = vmul.f32 %v550, 1.442695
        %v579 = vpow.pop %v578
        %v580 = vmul.f32 %v551, 1.442695
        %v581 = vpow.pop %v580
        %v582 = vmul.f32 %v552, 1.442695
        %v583 = vpow.pop %v582
        %v584 = vmul.f32 %v553, 1.442695
        %v585 = vpow.pop %v584
        %v586 = vadd.f32 %v555, 1.0
        %v587 = vadd.f32 %v557, 1.0
        %v588 = vadd.f32 %v559, 1.0
        %v589 = vadd.f32 %v561, 1.0
        %v590 = vadd.f32 %v563, 1.0
        %v591 = vadd.f32 %v565, 1.0
        %v592 = vadd.f32 %v567, 1.0
        %v593 = vadd.f32 %v569, 1.0
        %v594 = vadd.f32 %v571, 1.0
        %v595 = vadd.f32 %v573, 1.0
        %v596 = vadd.f32 %v575, 1.0
        %v597 = vadd.f32 %v577, 1.0
        %v598 = vadd.f32 %v579, 1.0
        %v599 = vadd.f32 %v581, 1.0
        %v600 = vadd.f32 %v583, 1.0
        %v601 = vadd.f32 %v585, 1.0
        %v602 = vrcp.pop %v586
        %v603 = vmul.f32 1.0, %v602
        %v604 = vrcp.pop %v587
        %v605 = vmul.f32 1.0, %v604
        %v606 = vrcp.pop %v588
        %v607 = vmul.f32 1.0, %v606
        %v608 = vrcp.pop %v589
        %v609 = vmul.f32 1.0, %v608
        %v610 = vrcp.pop %v590
        %v611 = vmul.f32 1.0, %v610
        %v612 = vrcp.pop %v591
        %v613 = vmul.f32 1.0, %v612
        %v614 = vrcp.pop %v592
        %v615 = vmul.f32 1.0, %v614
        %v616 = vrcp.pop %v593
        %v617 = vmul.f32 1.0, %v616
        %v618 = vrcp.pop %v594
        %v619 = vmul.f32 1.0, %v618
        %v620 = vrcp.pop %v595
        %v621 = vmul.f32 1.0, %v620
        %v622 = vrcp.pop %v596
        %v623 = vmul.f32 1.0, %v622
        %v624 = vrcp.pop %v597
        %v625 = vmul.f32 1.0, %v624
        %v626 = vrcp.pop %v598
        %v627 = vmul.f32 1.0, %v626
        %v628 = vrcp.pop %v599
        %v629 = vmul.f32 1.0, %v628
        %v630 = vrcp.pop %v600
        %v631 = vmul.f32 1.0, %v630
        %v632 = vrcp.pop %v601
        %v633 = vmul.f32 1.0, %v632
        %v634 = vmul.f32 %v522, %v603
        %v635 = vmul.f32 %v523, %v605
        %v636 = vmul.f32 %v524, %v607
        %v637 = vmul.f32 %v525, %v609
        %v638 = vmul.f32 %v526, %v611
        %v639 = vmul.f32 %v527, %v613
        %v640 = vmul.f32 %v528, %v615
        %v641 = vmul.f32 %v529, %v617
        %v642 = vmul.f32 %v530, %v619
        %v643 = vmul.f32 %v531, %v621
        %v644 = vmul.f32 %v532, %v623
        %v645 = vmul.f32 %v533, %v625
        %v646 = vmul.f32 %v534, %v627
        %v647 = vmul.f32 %v535, %v629
        %v648 = vmul.f32 %v536, %v631
        %v649 = vmul.f32 %v537, %v633
        %v650 = vpack.c.bf16 %v635, %v634
        %v651 = vpack.c.bf16 %v637, %v636
        %v652 = vpack.c.bf16 %v639, %v638
        %v653 = vpack.c.bf16 %v641, %v640
        %v654 = vpack.c.bf16 %v643, %v642
        %v655 = vpack.c.bf16 %v645, %v644
        %v656 = vpack.c.bf16 %v647, %v646
        %v657 = vpack.c.bf16 %v649, %v648
        %v658 = vld [vmem:[#allocation7] sm:$0xf]
        %v659 = vld [vmem:[#allocation7 + $0x4] sm:$0xf]
        %v660 = vld [vmem:[#allocation7 + $0x8] sm:$0xf]
        %v661 = vld [vmem:[#allocation7 + $0xc] sm:$0xf]
        %v662 = vld [vmem:[#allocation7 + $0x10] sm:$0xf]
        %v663 = vld [vmem:[#allocation7 + $0x14] sm:$0xf]
        %v664 = vld [vmem:[#allocation7 + $0x18] sm:$0xf]
        %v665 = vld [vmem:[#allocation7 + $0x1c] sm:$0xf]
        %v666 = vld [vmem:[#allocation7 + $0x20] sm:$0xf]
        %v667 = vld [vmem:[#allocation7 + $0x24] sm:$0xf]
        %v668 = vld [vmem:[#allocation7 + $0x28] sm:$0xf]
        %v669 = vld [vmem:[#allocation7 + $0x2c] sm:$0xf]
        %v670 = vld [vmem:[#allocation7 + $0x30] sm:$0xf]
        %v671 = vld [vmem:[#allocation7 + $0x34] sm:$0xf]
        %v672 = vld [vmem:[#allocation7 + $0x38] sm:$0xf]
        %v673 = vld [vmem:[#allocation7 + $0x3c] sm:$0xf]
        %v674 = vld [vmem:[#allocation8] sm:$0x1]
        %v676 = vlaneseq
        %v677 = vshrl.u32 %v676, 7
        %v678 = vsub.s32 0, %v677
        %v679 = vrot.slane %v674, %v678
        %v697 = vunpack.c.l.b16 %v658
        %v698 = vunpack.c.l.b16 %v659
        %v699 = vunpack.c.l.b16 %v660
        %v700 = vunpack.c.l.b16 %v661
        %v701 = vunpack.c.l.b16 %v662
        %v702 = vunpack.c.l.b16 %v663
        %v703 = vunpack.c.l.b16 %v664
        %v704 = vunpack.c.l.b16 %v665
        %v705 = vunpack.c.l.b16 %v666
        %v706 = vunpack.c.l.b16 %v667
        %v707 = vunpack.c.l.b16 %v668
        %v708 = vunpack.c.l.b16 %v669
        %v709 = vunpack.c.l.b16 %v670
        %v710 = vunpack.c.l.b16 %v671
        %v711 = vunpack.c.l.b16 %v672
        %v712 = vunpack.c.l.b16 %v673
        %v713 = vpack.c.b16 %v698, %v697
        %v714 = vpack.c.b16 %v700, %v699
        %v715 = vpack.c.b16 %v702, %v701
        %v716 = vpack.c.b16 %v704, %v703
        %v717 = vpack.c.b16 %v706, %v705
        %v718 = vpack.c.b16 %v708, %v707
        %v719 = vpack.c.b16 %v710, %v709
        %v720 = vpack.c.b16 %v712, %v711
        %729 = vmatprep.subr.bf16.mxu0 0
        %730 = vmatpush1.bf16.msra.mxu0 %v713
        %731 = vmatprep.subr.bf16.mxu0 0
        %732 = vmatpush1.bf16.msra.mxu0 %v714
        %733 = vmatprep.subr.bf16.mxu0 0
        %734 = vmatpush1.bf16.msra.mxu0 %v715
        %735 = vmatprep.subr.bf16.mxu0 0
        %736 = vmatpush1.bf16.msra.mxu0 %v716
        %737 = vmatprep.subr.bf16.mxu0 0
        %738 = vmatpush1.bf16.msra.mxu0 %v717
        %739 = vmatprep.subr.bf16.mxu0 0
        %740 = vmatpush1.bf16.msra.mxu0 %v718
        %741 = vmatprep.subr.bf16.mxu0 0
        %742 = vmatpush1.bf16.msra.mxu0 %v719
        %743 = vmatprep.subr.bf16.mxu0 0
        %744 = vmatpush1.bf16.msra.mxu0 %v720
        %745 = vmatprep.subr.bf16.mxu0 0
        %746 = vmatpush1.bf16.msra.mxu0 0
        %747 = vmatprep.subr.bf16.mxu0 0
        %748 = vmatpush1.bf16.msra.mxu0 0
        %749 = vmatprep.subr.bf16.mxu0 0
        %750 = vmatpush1.bf16.msra.mxu0 0
        %751 = vmatprep.subr.bf16.mxu0 0
        %752 = vmatpush1.bf16.msra.mxu0 0
        %753 = vmatprep.subr.bf16.mxu0 0
        %754 = vmatpush1.bf16.msra.mxu0 0
        %755 = vmatprep.subr.bf16.mxu0 0
        %756 = vmatpush1.bf16.msra.mxu0 0
        %757 = vmatprep.subr.bf16.mxu0 0
        %758 = vmatpush1.bf16.msra.mxu0 0
        %759 = vmatprep.subr.bf16.mxu0 0
        %760 = vmatpush1.bf16.msra.mxu0 0
        %761 = vmatprep.mubr.bf16.mxu0 0
        %762 = vmatmul.mubr.bf16.gmra.mrb[0].mxu0 %v650
        %v763 = vpop.f32.mrb[0].mxu0
        %v764 = vadd.f32 %v679, %v763
        %v765 = vpop.f32.mrb[0].mxu0
        %v766 = vpop.f32.mrb[0].mxu0
        %v767 = vadd.f32 %v679, %v766
        %v768 = vpop.f32.mrb[0].mxu0
        %769 = vmatprep.mubr.bf16.mxu0 0
        %770 = vmatmul.mubr.bf16.gmra.mrb[0].mxu0 %v651
        %v771 = vpop.f32.mrb[0].mxu0
        %v772 = vadd.f32 %v679, %v771
        %v773 = vpop.f32.mrb[0].mxu0
        %v774 = vpop.f32.mrb[0].mxu0
        %v775 = vadd.f32 %v679, %v774
        %v776 = vpop.f32.mrb[0].mxu0
        %777 = vmatprep.mubr.bf16.mxu0 0
        %778 = vmatmul.mubr.bf16.gmra.mrb[0].mxu0 %v652
        %v779 = vpop.f32.mrb[0].mxu0
        %v780 = vadd.f32 %v679, %v779
        %v781 = vpop.f32.mrb[0].mxu0
        %v782 = vpop.f32.mrb[0].mxu0
        %v783 = vadd.f32 %v679, %v782
        %v784 = vpop.f32.mrb[0].mxu0
        %785 = vmatprep.mubr.bf16.mxu0 0
        %786 = vmatmul.mubr.bf16.gmra.mrb[0].mxu0 %v653
        %v787 = vpop.f32.mrb[0].mxu0
        %v788 = vadd.f32 %v679, %v787
        %v789 = vpop.f32.mrb[0].mxu0
        %v790 = vpop.f32.mrb[0].mxu0
        %v791 = vadd.f32 %v679, %v790
        %v792 = vpop.f32.mrb[0].mxu0
        %793 = vmatprep.mubr.bf16.mxu0 0
        %794 = vmatmul.mubr.bf16.gmra.mrb[0].mxu0 %v654
        %v795 = vpop.f32.mrb[0].mxu0
        %v796 = vadd.f32 %v679, %v795
        %v797 = vpop.f32.mrb[0].mxu0
        %v798 = vpop.f32.mrb[0].mxu0
        %v799 = vadd.f32 %v679, %v798
        %v800 = vpop.f32.mrb[0].mxu0
        %801 = vmatprep.mubr.bf16.mxu0 0
        %802 = vmatmul.mubr.bf16.gmra.mrb[0].mxu0 %v655
        %v803 = vpop.f32.mrb[0].mxu0
        %v804 = vadd.f32 %v679, %v803
        %v805 = vpop.f32.mrb[0].mxu0
        %v806 = vpop.f32.mrb[0].mxu0
        %v807 = vadd.f32 %v679, %v806
        %v808 = vpop.f32.mrb[0].mxu0
        %809 = vmatprep.mubr.bf16.mxu0 0
        %810 = vmatmul.mubr.bf16.gmra.mrb[0].mxu0 %v656
        %v811 = vpop.f32.mrb[0].mxu0
        %v812 = vadd.f32 %v679, %v811
        %v813 = vpop.f32.mrb[0].mxu0
        %v814 = vpop.f32.mrb[0].mxu0
        %v815 = vadd.f32 %v679, %v814
        %v816 = vpop.f32.mrb[0].mxu0
        %817 = vmatprep.mubr.bf16.mxu0 0
        %818 = vmatmul.mubr.bf16.gmra.mrb[0].mxu0 %v657
        %v819 = vpop.f32.mrb[0].mxu0
        %v820 = vadd.f32 %v679, %v819
        %v821 = vpop.f32.mrb[0].mxu0
        %v822 = vpop.f32.mrb[0].mxu0
        %v823 = vadd.f32 %v679, %v822
        %v824 = vpop.f32.mrb[0].mxu0
        %825 = vdwg.mxu0
        %826 = vmax.xlane.f32.xlu0 %v764
        %v827 = vpop.xlane.xlu0 %826
        %828 = vmax.xlane.f32.xlu0 %v767
        %v829 = vpop.xlane.xlu0 %828
        %830 = vmax.xlane.f32.xlu0 %v772
        %v831 = vpop.xlane.xlu0 %830
        %832 = vmax.xlane.f32.xlu0 %v775
        %v833 = vpop.xlane.xlu0 %832
        %834 = vmax.xlane.f32.xlu0 %v780
        %v835 = vpop.xlane.xlu0 %834
        %836 = vmax.xlane.f32.xlu0 %v783
        %v837 = vpop.xlane.xlu0 %836
        %838 = vmax.xlane.f32.xlu0 %v788
        %v839 = vpop.xlane.xlu0 %838
        %840 = vmax.xlane.f32.xlu0 %v791
        %v841 = vpop.xlane.xlu0 %840
        %842 = vmax.xlane.f32.xlu0 %v796
        %v843 = vpop.xlane.xlu0 %842
        %844 = vmax.xlane.f32.xlu0 %v799
        %v845 = vpop.xlane.xlu0 %844
        %846 = vmax.xlane.f32.xlu0 %v804
        %v847 = vpop.xlane.xlu0 %846
        %848 = vmax.xlane.f32.xlu0 %v807
        %v849 = vpop.xlane.xlu0 %848
        %850 = vmax.xlane.f32.xlu0 %v812
        %v851 = vpop.xlane.xlu0 %850
        %852 = vmax.xlane.f32.xlu0 %v815
        %v853 = vpop.xlane.xlu0 %852
        %854 = vmax.xlane.f32.xlu0 %v820
        %v855 = vpop.xlane.xlu0 %854
        %856 = vmax.xlane.f32.xlu0 %v823
        %v857 = vpop.xlane.xlu0 %856
        %v858 = vsub.f32 %v764, %v827
        %v859 = vsub.f32 %v767, %v829
        %v860 = vsub.f32 %v772, %v831
        %v861 = vsub.f32 %v775, %v833
        %v862 = vsub.f32 %v780, %v835
        %v863 = vsub.f32 %v783, %v837
        %v864 = vsub.f32 %v788, %v839
        %v865 = vsub.f32 %v791, %v841
        %v866 = vsub.f32 %v796, %v843
        %v867 = vsub.f32 %v799, %v845
        %v868 = vsub.f32 %v804, %v847
        %v869 = vsub.f32 %v807, %v849
        %v870 = vsub.f32 %v812, %v851
        %v871 = vsub.f32 %v815, %v853
        %v872 = vsub.f32 %v820, %v855
        %v873 = vsub.f32 %v823, %v857
        %v874 = vmul.f32 %v858, 1.442695
        %v875 = vpow.pop %v874
        %v876 = vmul.f32 %v859, 1.442695
        %v877 = vpow.pop %v876
        %v878 = vmul.f32 %v860, 1.442695
        %v879 = vpow.pop %v878
        %v880 = vmul.f32 %v861, 1.442695
        %v881 = vpow.pop %v880
        %v882 = vmul.f32 %v862, 1.442695
        %v883 = vpow.pop %v882
        %v884 = vmul.f32 %v863, 1.442695
        %v885 = vpow.pop %v884
        %v886 = vmul.f32 %v864, 1.442695
        %v887 = vpow.pop %v886
        %v888 = vmul.f32 %v865, 1.442695
        %v889 = vpow.pop %v888
        %v890 = vmul.f32 %v866, 1.442695
        %v891 = vpow.pop %v890
        %v892 = vmul.f32 %v867, 1.442695
        %v893 = vpow.pop %v892
        %v894 = vmul.f32 %v868, 1.442695
        %v895 = vpow.pop %v894
        %v896 = vmul.f32 %v869, 1.442695
        %v897 = vpow.pop %v896
        %v898 = vmul.f32 %v870, 1.442695
        %v899 = vpow.pop %v898
        %v900 = vmul.f32 %v871, 1.442695
        %v901 = vpow.pop %v900
        %v902 = vmul.f32 %v872, 1.442695
        %v903 = vpow.pop %v902
        %v904 = vmul.f32 %v873, 1.442695
        %v905 = vpow.pop %v904
        %906 = vadd.xlane.f32.xlu0 %v875
        %v907 = vpop.xlane.xlu0 %906
        %908 = vadd.xlane.f32.xlu0 %v877
        %v909 = vpop.xlane.xlu0 %908
        %910 = vadd.xlane.f32.xlu0 %v879
        %v911 = vpop.xlane.xlu0 %910
        %912 = vadd.xlane.f32.xlu0 %v881
        %v913 = vpop.xlane.xlu0 %912
        %914 = vadd.xlane.f32.xlu0 %v883
        %v915 = vpop.xlane.xlu0 %914
        %916 = vadd.xlane.f32.xlu0 %v885
        %v917 = vpop.xlane.xlu0 %916
        %918 = vadd.xlane.f32.xlu0 %v887
        %v919 = vpop.xlane.xlu0 %918
        %920 = vadd.xlane.f32.xlu0 %v889
        %v921 = vpop.xlane.xlu0 %920
        %922 = vadd.xlane.f32.xlu0 %v891
        %v923 = vpop.xlane.xlu0 %922
        %924 = vadd.xlane.f32.xlu0 %v893
        %v925 = vpop.xlane.xlu0 %924
        %926 = vadd.xlane.f32.xlu0 %v895
        %v927 = vpop.xlane.xlu0 %926
        %928 = vadd.xlane.f32.xlu0 %v897
        %v929 = vpop.xlane.xlu0 %928
        %930 = vadd.xlane.f32.xlu0 %v899
        %v931 = vpop.xlane.xlu0 %930
        %932 = vadd.xlane.f32.xlu0 %v901
        %v933 = vpop.xlane.xlu0 %932
        %934 = vadd.xlane.f32.xlu0 %v903
        %v935 = vpop.xlane.xlu0 %934
        %936 = vadd.xlane.f32.xlu0 %v905
        %v937 = vpop.xlane.xlu0 %936
        %v938 = vlog2.pop %v907
        %v939 = vmul.f32 %v938, 0.6931472
        %v940 = vlog2.pop %v909
        %v941 = vmul.f32 %v940, 0.6931472
        %v942 = vlog2.pop %v911
        %v943 = vmul.f32 %v942, 0.6931472
        %v944 = vlog2.pop %v913
        %v945 = vmul.f32 %v944, 0.6931472
        %v946 = vlog2.pop %v915
        %v947 = vmul.f32 %v946, 0.6931472
        %v948 = vlog2.pop %v917
        %v949 = vmul.f32 %v948, 0.6931472
        %v950 = vlog2.pop %v919
        %v951 = vmul.f32 %v950, 0.6931472
        %v952 = vlog2.pop %v921
        %v953 = vmul.f32 %v952, 0.6931472
        %v954 = vlog2.pop %v923
        %v955 = vmul.f32 %v954, 0.6931472
        %v956 = vlog2.pop %v925
        %v957 = vmul.f32 %v956, 0.6931472
        %v958 = vlog2.pop %v927
        %v959 = vmul.f32 %v958, 0.6931472
        %v960 = vlog2.pop %v929
        %v961 = vmul.f32 %v960, 0.6931472
        %v962 = vlog2.pop %v931
        %v963 = vmul.f32 %v962, 0.6931472
        %v964 = vlog2.pop %v933
        %v965 = vmul.f32 %v964, 0.6931472
        %v966 = vlog2.pop %v935
        %v967 = vmul.f32 %v966, 0.6931472
        %v968 = vlog2.pop %v937
        %v969 = vmul.f32 %v968, 0.6931472
        %v970 = vsub.f32 %v858, %v939
        %v971 = vsub.f32 %v859, %v941
        %v972 = vsub.f32 %v860, %v943
        %v973 = vsub.f32 %v861, %v945
        %v974 = vsub.f32 %v862, %v947
        %v975 = vsub.f32 %v863, %v949
        %v976 = vsub.f32 %v864, %v951
        %v977 = vsub.f32 %v865, %v953
        %v978 = vsub.f32 %v866, %v955
        %v979 = vsub.f32 %v867, %v957
        %v980 = vsub.f32 %v868, %v959
        %v981 = vsub.f32 %v869, %v961
        %v982 = vsub.f32 %v870, %v963
        %v983 = vsub.f32 %v871, %v965
        %v984 = vsub.f32 %v872, %v967
        %v985 = vsub.f32 %v873, %v969
        %986 = vst [vmem:[%s298] sm:$0xff] %v970
        %987 = vst [vmem:[%s298 + $0x8] sm:$0xff] %v971
        %988 = vst [vmem:[%s298 + $0x10] sm:$0xff] %v972
        %989 = vst [vmem:[%s298 + $0x18] sm:$0xff] %v973
        %990 = vst [vmem:[%s298 + $0x20] sm:$0xff] %v974
        %991 = vst [vmem:[%s298 + $0x28] sm:$0xff] %v975
        %992 = vst [vmem:[%s298 + $0x30] sm:$0xff] %v976
        %993 = vst [vmem:[%s298 + $0x38] sm:$0xff] %v977
        %994 = vst [vmem:[%s298 + $0x40] sm:$0xff] %v978
        %995 = vst [vmem:[%s298 + $0x48] sm:$0xff] %v979
        %996 = vst [vmem:[%s298 + $0x50] sm:$0xff] %v980
        %997 = vst [vmem:[%s298 + $0x58] sm:$0xff] %v981
        %998 = vst [vmem:[%s298 + $0x60] sm:$0xff] %v982
        %999 = vst [vmem:[%s298 + $0x68] sm:$0xff] %v983
        %1000 = vst [vmem:[%s298 + $0x70] sm:$0xff] %v984
        %1001 = vst [vmem:[%s298 + $0x78] sm:$0xff] %v985
        %s1002 = sand.u32 %s143, 1
        %s1003 = scalar_lea.sflag [#allocation4], %s1002
        %s1004 = sand.u32 %s143, 1
        %s1005 = smul.addr %s1004, 128
        %s1006 = scalar_lea.vmem [#allocation10], %s1005
        // Predicated region
        $region53: #{tpu_custom_call.1} parent=35 // pred_check
          %p1007 = pneg %p153
        $region54: #{tpu_custom_call.1} parent=35 // pred_check_branch
          %1009 = sbr.rel (%p1007) target = $region56
        $region55: #{tpu_custom_call.1} parent=35 // pred_region
          %s1010 = smul.u32 8, %s30
          %s1012 = ssub.s32 2048, 2048
          %1013 = vsyncadd %s1003, %s1012
          %s1014 = smul.addr %s1010, 2
          %s1015 = smul.addr %s29, 16
          %s1016 = sadd.s32 %s1014, %s1015
          %s1017 = smul.addr %s1016, 128
          %s1018 = scalar_lea.hbm %s4, %s1017
          %s1019 = sshll.u32 %s1006, 4
          %s1020 = int_to_ptr.vmem [resolvable:$true] %s1019
          %1025 = dma.vmem_to_hbm [thread:$0]  %s1020, 2048, %s1018, %s1003, 128, 128, 8
        $region56: #{tpu_custom_call.1} parent=35 // pred_fallthru
          _
      $region36: #{tpu_custom_call.1} parent=5 // pred_fallthru
        _
      %p1026 = scmp.le.s32.totalorder 2, %s20
      // Predicated region
      $region57: #{tpu_custom_call.1} parent=5 // pred_check
        %p1027 = pneg %p1026
      $region58: #{tpu_custom_call.1} parent=5 // pred_check_branch
        %1029 = sbr.rel (%p1027) target = $region60
      $region59: #{tpu_custom_call.1} parent=5 // pred_region
        %s1030 = ssub.s32 %s20, 2
        // Predicated region
        $region61: #{tpu_custom_call.1} parent=59 // pred_check
          %p1031 = pneg %p159
        $region62: #{tpu_custom_call.1} parent=59 // pred_check_branch
          %1033 = sbr.rel (%p1031) target = $region64
        $region63: #{tpu_custom_call.1} parent=59 // pred_region
          %s1034 = sand.u32 %s144, 1
          %s1035 = scalar_lea.sflag [#allocation4], %s1034
          %s1036 = sand.u32 %s144, 1
          %s1037 = smul.addr %s1036, 128
          %s1038 = scalar_lea.vmem [#allocation10], %s1037
          %1039 = dma.done %s1035, 2048
        $region64: #{tpu_custom_call.1} parent=59 // pred_fallthru
          _
      $region60: #{tpu_custom_call.1} parent=5 // pred_fallthru
        _
    $region6: #{tpu_custom_call.1} parent=1 // loop_footer
      %s24 = sadd.s32 1, %s20
    $region7: #{tpu_custom_call.1} parent=1 // loop_footer_branch
      %19 = sbr.rel target = $region3
    $region8: #{tpu_custom_call.1} parent=1 // loop_exit
      _
    %1040 = vsyncpa [#allocation3], 1
    %s1041 = scalar_lea.sflag [#allocation3], 1
    %1042 = vsyncpa %s1041, 1
    %1043 = vsyncpa [#allocation6], 1
    %s1044 = scalar_lea.sflag [#allocation6], 1
    %1045 = vsyncpa %s1044, 1
    %1046 = vsyncpa [#allocation9], 1
    %1047 = vsyncpa [#allocation4], 1
    %s1048 = scalar_lea.sflag [#allocation4], 1
    %1049 = vsyncpa %s1048, 1

// kernel: tpu_custom_call.1
$region0: #{tpu_custom_call.1}
  #allocation0 [shape = 'u32[]', space=smem, size = 0x4, offset = 0x4, fixed_abs, tag = 'smem constant byte address 0x4 - core index']
  #allocation1 [shape = 'u32[144,128]{1,0:T(1,128)}', space=vmem, size = 0x12000, scoped, tag = 'internal scratch']
  %s0 = inlined_call_operand.hbm [shape: bf16[2,8,256], index: 0, kind: input, shape index: {}]
  %s1 = inlined_call_operand.hbm [shape: bf16[2,16,256], index: 1, kind: input, shape index: {}]
  %s2 = inlined_call_operand.hbm [shape: bf16[128,128], index: 2, kind: input, shape index: {}]
  %s3 = inlined_call_operand.hbm [shape: f32[1,128], index: 3, kind: input, shape index: {}]
  %s4 = inlined_call_operand.hbm [shape: f32[2,8,16,128], index: 4, kind: output, shape index: {}]
  %s5 = sld [smem:[#allocation0]]
  $region65: #{tpu_custom_call.1} parent=0
    _
  %s7 = ssub.s32 1, %s5
  %s8 = scalar_select 0, %s7, %s5
  $region1: #{tpu_custom_call.1} parent=0
    #allocation2 [shape = 'u8[8192]{0}', space=vmem, size = 0x2000, scoped, tag = 'input window, operand 0']
    #allocation3 [shape = 's32[2]{0}', space=sflag, size = 0x8, scoped, tag = 'scoped memory for tpu_custom_call.1']
    #allocation4 [shape = 's32[2]{0}', space=sflag, size = 0x8, scoped, tag = 'scoped memory for tpu_custom_call.1']
    #allocation5 [shape = 'u8[16384]{0}', space=vmem, size = 0x4000, scoped, tag = 'input window, operand 1']
    #allocation6 [shape = 's32[2]{0}', space=sflag, size = 0x8, scoped, tag = 'scoped memory for tpu_custom_call.1']
    #allocation7 [shape = 'u8[32768]{0}', space=vmem, size = 0x8000, scoped, tag = 'input window, operand 2, single buffered']
    #allocation8 [shape = 'u8[512]{0}', space=vmem, size = 0x400, scoped, tag = 'input window, operand 3, single buffered']
    #allocation9 [shape = 's32[1]{0}', space=sflag, size = 0x4, scoped, tag = 'scoped memory for tpu_custom_call.1']
    #allocation10 [shape = 'u8[131072]{0}', space=vmem, size = 0x20000, scoped, tag = 'output window, operand 0']
    %9 = vsyncpa [#allocation3], 0
    %s10 = scalar_lea.sflag [#allocation3], 1
    %11 = vsyncpa %s10, 0
    %12 = vsyncpa [#allocation6], 0
    %s13 = scalar_lea.sflag [#allocation6], 1
    %14 = vsyncpa %s13, 0
    %15 = vsyncpa [#allocation9], 0
    %16 = vsyncpa [#allocation4], 0
    %s17 = scalar_lea.sflag [#allocation4], 1
    %18 = vsyncpa %s17, 0
    loop: start=0, step=1, limit=4
    $region2: #{tpu_custom_call.1} parent=1 // loop_pre_header
      _
    $region3: #{tpu_custom_call.1} parent=1 // loop_header
      %s20 = sphi 0, %s24
      %p21 = scmp.ge.s32.totalorder %s20, 4
      %s27 = sphi 0, %s39
      %s28 = sphi 0, %s35
      %s29 = sphi 0, %s27
      %s30 = sphi 0, %s28
      %s31 = sphi 0, %s29
      %s32 = sphi 0, %s30
      %s44 = sphi 0, %s46
      %s47 = sphi 0, %s44
      %s48 = sphi 0, %s47
      %s64 = sphi 0, %s48
      %s70 = sphi 0, %s72
      %s73 = sphi 0, %s70
      %s74 = sphi 0, %s73
      %s90 = sphi 0, %s74
      %s94 = sphi 0, %s94
      %s96 = sphi 0, %s94
      %s97 = sphi 0, %s96
      %s111 = sphi 0, %s97
      %s115 = sphi 0, %s115
      %s117 = sphi 0, %s115
      %s118 = sphi 0, %s117
      %s132 = sphi 0, %s118
      %s140 = sphi 0, %s142
      %s143 = sphi 0, %s140
      %s144 = sphi 0, %s143
      %s160 = sphi 0, %s144
    $region4: #{tpu_custom_call.1} parent=1 // loop_header_branch
      %23 = sbr.rel (%p21) target = $region8
    $region5: #{tpu_custom_call.1} parent=1 // loop_body
      %s25 = ssub.s32 %s20, 1
      %s26 = ssub.s32 %s20, 2
      %s33 = sadd.s32 1, %s28
      %p34 = scmp.ge.s32.totalorder %s33, 1
      %s35 = scalar_select %p34, 0, %s33
      %s36 = sadd.s32 1, %s27
      %s37 = scalar_select %p34, %s36, %s27
      %p38 = scmp.ge.s32.totalorder %s37, 2
      %s39 = scalar_select %p38, 0, %s37
      %s40 = ssub.s32 %s27, %s39
      %s41 = ssub.s32 %s28, %s35
      %s42 = sor.u32 %s40, %s41
      %p43 = scmp.eq.s32.totalorder %s42, 0
      %s45 = sadd.s32 %s44, 1
      %s46 = scalar_select %p43, %s44, %s45
      %p49 = pneg %p43
      %p50 = scmp.eq.s32.totalorder %s20, 1
      %p51 = por %p49, %p50
      %p52 = scmp.ne.s32.totalorder %s44, %s47
      %p53 = scmp.eq.s32.totalorder %s20, 0
      %p54 = por %p52, %p53
      %p55 = scmp.ne.s32.totalorder %s44, %s47
      %p56 = scmp.eq.s32.totalorder %s25, 1
      %p57 = por %p55, %p56
      %p58 = scmp.ne.s32.totalorder %s47, %s48
      %p59 = scmp.eq.s32.totalorder %s25, 0
      %p60 = por %p58, %p59
      %p61 = scmp.ne.s32.totalorder %s47, %s48
      %p62 = scmp.eq.s32.totalorder %s26, 1
      %p63 = por %p61, %p62
      %p65 = scmp.ne.s32.totalorder %s48, %s64
      %p66 = scmp.eq.s32.totalorder %s26, 0
      %p67 = por %p65, %p66
      %s68 = ssub.s32 %s27, %s39
      %p69 = scmp.eq.s32.totalorder %s68, 0
      %s71 = sadd.s32 %s70, 1
      %s72 = scalar_select %p69, %s70, %s71
      %p75 = pneg %p69
      %p76 = scmp.eq.s32.totalorder %s20, 1
      %p77 = por %p75, %p76
      %p78 = scmp.ne.s32.totalorder %s70, %s73
      %p79 = scmp.eq.s32.totalorder %s20, 0
      %p80 = por %p78, %p79
      %p81 = scmp.ne.s32.totalorder %s70, %s73
      %p82 = scmp.eq.s32.totalorder %s25, 1
      %p83 = por %p81, %p82
      %p84 = scmp.ne.s32.totalorder %s73, %s74
      %p85 = scmp.eq.s32.totalorder %s25, 0
      %p86 = por %p84, %p85
      %p87 = scmp.ne.s32.totalorder %s73, %s74
      %p88 = scmp.eq.s32.totalorder %s26, 1
      %p89 = por %p87, %p88
      %p91 = scmp.ne.s32.totalorder %s74, %s90
      %p92 = scmp.eq.s32.totalorder %s26, 0
      %p93 = por %p91, %p92
      %s95 = sadd.s32 %s94, 1
      %p98 = scmp.eq.s32.totalorder %s20, 1
      %p99 = scmp.ne.s32.totalorder %s94, %s96
      %p100 = scmp.eq.s32.totalorder %s20, 0
      %p101 = por %p99, %p100
      %p102 = scmp.ne.s32.totalorder %s94, %s96
      %p103 = scmp.eq.s32.totalorder %s25, 1
      %p104 = por %p102, %p103
      %p105 = scmp.ne.s32.totalorder %s96, %s97
      %p106 = scmp.eq.s32.totalorder %s25, 0
      %p107 = por %p105, %p106
      %p108 = scmp.ne.s32.totalorder %s96, %s97
      %p109 = scmp.eq.s32.totalorder %s26, 1
      %p110 = por %p108, %p109
      %p112 = scmp.ne.s32.totalorder %s97, %s111
      %p113 = scmp.eq.s32.totalorder %s26, 0
      %p114 = por %p112, %p113
      %s116 = sadd.s32 %s115, 1
      %p119 = scmp.eq.s32.totalorder %s20, 1
      %p120 = scmp.ne.s32.totalorder %s115, %s117
      %p121 = scmp.eq.s32.totalorder %s20, 0
      %p122 = por %p120, %p121
      %p123 = scmp.ne.s32.totalorder %s115, %s117
      %p124 = scmp.eq.s32.totalorder %s25, 1
      %p125 = por %p123, %p124
      %p126 = scmp.ne.s32.totalorder %s117, %s118
      %p127 = scmp.eq.s32.totalorder %s25, 0
      %p128 = por %p126, %p127
      %p129 = scmp.ne.s32.totalorder %s117, %s118
      %p130 = scmp.eq.s32.totalorder %s26, 1
      %p131 = por %p129, %p130
      %p133 = scmp.ne.s32.totalorder %s118, %s132
      %p134 = scmp.eq.s32.totalorder %s26, 0
      %p135 = por %p133, %p134
      %s136 = ssub.s32 %s27, %s39
      %s137 = ssub.s32 %s28, %s35
      %s138 = sor.u32 %s136, %s137
      %p139 = scmp.eq.s32.totalorder %s138, 0
      %s141 = sadd.s32 %s140, 1
      %s142 = scalar_select %p139, %s140, %s141
      %p145 = pneg %p139
      %p146 = scmp.eq.s32.totalorder %s20, 1
      %p147 = por %p145, %p146
      %p148 = scmp.ne.s32.totalorder %s140, %s143
      %p149 = scmp.eq.s32.totalorder %s20, 0
      %p150 = por %p148, %p149
      %p151 = scmp.ne.s32.totalorder %s140, %s143
      %p152 = scmp.eq.s32.totalorder %s25, 1
      %p153 = por %p151, %p152
      %p154 = scmp.ne.s32.totalorder %s143, %s144
      %p155 = scmp.eq.s32.totalorder %s25, 0
      %p156 = por %p154, %p155
      %p157 = scmp.ne.s32.totalorder %s143, %s144
      %p158 = scmp.eq.s32.totalorder %s26, 1
      %p159 = por %p157, %p158
      %p161 = scmp.ne.s32.totalorder %s144, %s160
      %p162 = scmp.eq.s32.totalorder %s26, 0
      %p163 = por %p161, %p162
      %p164 = scmp.le.s32.totalorder 1, %s20
      %p165 = scmp.lt.s32.totalorder %s20, 3
      %p166 = pnand %p164, %p165
      %p167 = pneg %p166
      // Predicated region
      $region9: #{tpu_custom_call.1} parent=5 // pred_check
        _
      $region10: #{tpu_custom_call.1} parent=5 // pred_check_branch
        %169 = sbr.rel (%p166) target = $region12
      $region11: #{tpu_custom_call.1} parent=5 // pred_region
        %s170 = ssub.s32 %s20, 1
        // Predicated region
        $region13: #{tpu_custom_call.1} parent=11 // pred_check
          %p171 = pneg %p107
        $region14: #{tpu_custom_call.1} parent=11 // pred_check_branch
          %173 = sbr.rel (%p171) target = $region16
        $region15: #{tpu_custom_call.1} parent=11 // pred_region
          %s175 = ssub.s32 1024, 1024
          %176 = vsyncadd [#allocation6], %s175
          %s177 = sshll.u32 [#allocation7], 4
          %s178 = int_to_ptr.vmem [resolvable:$true] %s177
          %183 = dma.hbm_to_vmem [thread:$0]  %s2, 1024, %s178, [#allocation6], 64, 64, 4
        $region16: #{tpu_custom_call.1} parent=11 // pred_fallthru
          _
        // Predicated region
        $region17: #{tpu_custom_call.1} parent=11 // pred_check
          %p184 = pneg %p128
        $region18: #{tpu_custom_call.1} parent=11 // pred_check_branch
          %186 = sbr.rel (%p184) target = $region20
        $region19: #{tpu_custom_call.1} parent=11 // pred_region
          %s188 = ssub.s32 16, 16
          %189 = vsyncadd [#allocation9], %s188
          %s191 = sshll.u32 [#allocation8], 4
          %s192 = int_to_ptr.vmem [resolvable:$true] %s191
          %194 = dma.hbm_to_vmem [thread:$0]  %s3, 16, %s192, [#allocation9]
        $region20: #{tpu_custom_call.1} parent=11 // pred_fallthru
          _
      $region12: #{tpu_custom_call.1} parent=5 // pred_fallthru
        _
      %p195 = scmp.lt.s32.totalorder %s20, 2
      // Predicated region
      $region21: #{tpu_custom_call.1} parent=5 // pred_check
        %p196 = pneg %p195
      $region22: #{tpu_custom_call.1} parent=5 // pred_check_branch
        %198 = sbr.rel (%p196) target = $region24
      $region23: #{tpu_custom_call.1} parent=5 // pred_region
        // Predicated region
        $region25: #{tpu_custom_call.1} parent=23 // pred_check
          %p199 = pneg %p54
        $region26: #{tpu_custom_call.1} parent=23 // pred_check_branch
          %201 = sbr.rel (%p199) target = $region28
        $region27: #{tpu_custom_call.1} parent=23 // pred_region
          %s202 = sand.u32 %s44, 1
          %s203 = scalar_lea.sflag [#allocation3], %s202
          %s204 = sand.u32 %s44, 1
          %s205 = smul.addr %s204, 8
          %s206 = scalar_lea.vmem [#allocation2], %s205
          %s208 = ssub.s32 128, 128
          %209 = vsyncadd %s203, %s208
          %s210 = smul.addr %s28, 2
          %s211 = smul.addr %s27, 2
          %s212 = sadd.s32 %s210, %s211
          %s213 = smul.addr %s212, 64
          %s214 = scalar_lea.hbm %s0, %s213
          %s216 = sshll.u32 %s206, 4
          %s217 = int_to_ptr.vmem [resolvable:$true] %s216
          %219 = dma.hbm_to_vmem [thread:$0]  %s214, 128, %s217, %s203
        $region28: #{tpu_custom_call.1} parent=23 // pred_fallthru
          _
        // Predicated region
        $region29: #{tpu_custom_call.1} parent=23 // pred_check
          %p220 = pneg %p80
        $region30: #{tpu_custom_call.1} parent=23 // pred_check_branch
          %222 = sbr.rel (%p220) target = $region32
        $region31: #{tpu_custom_call.1} parent=23 // pred_region
          %s223 = sand.u32 %s20, 1
          %s224 = scalar_lea.sflag [#allocation6], %s223
          %s225 = sand.u32 %s70, 1
          %s226 = smul.addr %s225, 16
          %s227 = scalar_lea.vmem [#allocation5], %s226
          %s229 = ssub.s32 256, 256
          %230 = vsyncadd %s224, %s229
          %s231 = smul.addr %s27, 4
          %s232 = smul.addr %s231, 64
          %s233 = scalar_lea.hbm %s1, %s232
          %s234 = sshll.u32 %s227, 4
          %s235 = int_to_ptr.vmem [resolvable:$true] %s234
          %240 = dma.hbm_to_vmem [thread:$0]  %s233, 256, %s235, %s224, 128, 128, 8
        $region32: #{tpu_custom_call.1} parent=23 // pred_fallthru
          _
      $region24: #{tpu_custom_call.1} parent=5 // pred_fallthru
        _
      %p241 = scmp.le.s32.totalorder 1, %s20
      %p242 = scmp.lt.s32.totalorder %s20, 3
      %p243 = pnand %p241, %p242
      %p244 = pneg %p243
      // Predicated region
      $region33: #{tpu_custom_call.1} parent=5 // pred_check
        _
      $region34: #{tpu_custom_call.1} parent=5 // pred_check_branch
        %246 = sbr.rel (%p243) target = $region36
      $region35: #{tpu_custom_call.1} parent=5 // pred_region
        %s247 = ssub.s32 %s20, 1
        %s248 = sand.u32 %s47, 1
        %s249 = scalar_lea.sflag [#allocation3], %s248
        %s250 = sand.u32 %s47, 1
        %s251 = smul.addr %s250, 8
        %s252 = scalar_lea.vmem [#allocation2], %s251
        // Predicated region
        $region37: #{tpu_custom_call.1} parent=35 // pred_check
          %p253 = pneg %p60
        $region38: #{tpu_custom_call.1} parent=35 // pred_check_branch
          %255 = sbr.rel (%p253) target = $region40
        $region39: #{tpu_custom_call.1} parent=35 // pred_region
          %256 = dma.done %s249, 128
        $region40: #{tpu_custom_call.1} parent=35 // pred_fallthru
          _
        %s257 = sand.u32 %s25, 1
        %s258 = scalar_lea.sflag [#allocation6], %s257
        %s259 = sand.u32 %s73, 1
        %s260 = smul.addr %s259, 16
        %s261 = scalar_lea.vmem [#allocation5], %s260
        // Predicated region
        $region41: #{tpu_custom_call.1} parent=35 // pred_check
          %p262 = pneg %p86
        $region42: #{tpu_custom_call.1} parent=35 // pred_check_branch
          %264 = sbr.rel (%p262) target = $region44
        $region43: #{tpu_custom_call.1} parent=35 // pred_region
          %265 = dma.done %s258, 256
        $region44: #{tpu_custom_call.1} parent=35 // pred_fallthru
          _
        // Predicated region
        $region45: #{tpu_custom_call.1} parent=35 // pred_check
          %p266 = pneg %p107
        $region46: #{tpu_custom_call.1} parent=35 // pred_check_branch
          %268 = sbr.rel (%p266) target = $region48
        $region47: #{tpu_custom_call.1} parent=35 // pred_region
          %269 = dma.done [#allocation6], 1024
        $region48: #{tpu_custom_call.1} parent=35 // pred_fallthru
          _
        // Predicated region
        $region49: #{tpu_custom_call.1} parent=35 // pred_check
          %p270 = pneg %p128
        $region50: #{tpu_custom_call.1} parent=35 // pred_check_branch
          %272 = sbr.rel (%p270) target = $region52
        $region51: #{tpu_custom_call.1} parent=35 // pred_region
          %273 = dma.done [#allocation9], 16
        $region52: #{tpu_custom_call.1} parent=35 // pred_fallthru
          _
        %s274 = sand.u32 %s47, 1
        %s275 = scalar_lea.sflag [#allocation3], %s274
        %s276 = sand.u32 %s47, 1
        %s277 = smul.addr %s276, 8
        %s278 = scalar_lea.vmem [#allocation2], %s277
        %p279 = pneg %p60
        %p280 = pneg %p57
        %s281 = sand.u32 %s25, 1
        %s282 = scalar_lea.sflag [#allocation6], %s281
        %s283 = sand.u32 %s73, 1
        %s284 = smul.addr %s283, 16
        %s285 = scalar_lea.vmem [#allocation5], %s284
        %p286 = pneg %p86
        %p287 = pneg %p83
        %p288 = pneg %p107
        %p289 = pneg %p104
        %p290 = pneg %p128
        %p291 = pneg %p125
        %p292 = pneg %p156
        %p293 = pneg %p153
        %s294 = sand.u32 %s143, 1
        %s295 = scalar_lea.sflag [#allocation4], %s294
        %s296 = sand.u32 %s143, 1
        %s297 = smul.addr %s296, 128
        %s298 = scalar_lea.vmem [#allocation10], %s297
        %s299 = smul.u32 8, %s30
        %v301 = vld [vmem:[%s252] sm:$0xff]
        %v302 = vunpack.c.l.bf16 %v301
        %v303 = vunpack.c.h.bf16 %v301
        %v304 = vld [vmem:[%s261] sm:$0xff]
        %v305 = vld [vmem:[%s261 + $0x8] sm:$0xff]
        %v306 = vunpack.c.l.bf16 %v304
        %v307 = vunpack.c.h.bf16 %v304
        %v308 = vunpack.c.l.bf16 %v305
        %v309 = vunpack.c.h.bf16 %v305
        %v311 = vcombine.high %v302, %v302
        %v313 = vunpack.c.l.s4 1966171168
        %v314 = vunpack.c.0.s8 %v313
        %v315 = vlaneseq
        %v316 = vshrl.u32 %v315, 7
        %v317 = vsub.s32 %v314, %v316
        %v318 = vrot.slane %v302, %v317
        %v320 = vunpack.c.l.s4 1966171168
        %v321 = vunpack.c.0.s8 %v320
        %v322 = vlaneseq
        %v323 = vshrl.u32 %v322, 7
        %v324 = vsub.s32 %v321, %v323
        %v325 = vrot.slane %v311, %v324
        %v326 = vcombine.high %v318, %v318
        %v327 = vcombine.high %v325, %v325
        %v329 = vunpack.c.l.s4 1966171168
        %v330 = vunpack.c.0.s8 %v329
        %v331 = vlaneseq
        %v332 = vshrl.u32 %v331, 7
        %v333 = vsub.s32 %v330, %v332
        %v334 = vrot.slane %v318, %v333
        %v336 = vunpack.c.l.s4 1966171168
        %v337 = vunpack.c.0.s8 %v336
        %v338 = vlaneseq
        %v339 = vshrl.u32 %v338, 7
        %v340 = vsub.s32 %v337, %v339
        %v341 = vrot.slane %v325, %v340
        %v343 = vunpack.c.l.s4 1966171168
        %v344 = vunpack.c.0.s8 %v343
        %v345 = vlaneseq
        %v346 = vshrl.u32 %v345, 7
        %v347 = vsub.s32 %v344, %v346
        %v348 = vrot.slane %v326, %v347
        %v350 = vunpack.c.l.s4 1966171168
        %v351 = vunpack.c.0.s8 %v350
        %v352 = vlaneseq
        %v353 = vshrl.u32 %v352, 7
        %v354 = vsub.s32 %v351, %v353
        %v355 = vrot.slane %v327, %v354
        %v356 = vcombine.high %v334, %v334
        %v357 = vcombine.high %v341, %v341
        %v358 = vcombine.high %v348, %v348
        %v359 = vcombine.high %v355, %v355
        %v360 = vlaneseq
        %v361 = vshrl.u32 %v360, 7
        %v362 = vsub.s32 0, %v361
        %v363 = vrot.slane %v334, %v362
        %v364 = vlaneseq
        %v365 = vshrl.u32 %v364, 7
        %v366 = vsub.s32 0, %v365
        %v367 = vrot.slane %v348, %v366
        %v368 = vlaneseq
        %v369 = vshrl.u32 %v368, 7
        %v370 = vsub.s32 0, %v369
        %v371 = vrot.slane %v356, %v370
        %v372 = vlaneseq
        %v373 = vshrl.u32 %v372, 7
        %v374 = vsub.s32 0, %v373
        %v375 = vrot.slane %v358, %v374
        %v376 = vlaneseq
        %v377 = vshrl.u32 %v376, 7
        %v378 = vsub.s32 0, %v377
        %v379 = vrot.slane %v341, %v378
        %v380 = vlaneseq
        %v381 = vshrl.u32 %v380, 7
        %v382 = vsub.s32 0, %v381
        %v383 = vrot.slane %v355, %v382
        %v384 = vlaneseq
        %v385 = vshrl.u32 %v384, 7
        %v386 = vsub.s32 0, %v385
        %v387 = vrot.slane %v357, %v386
        %v388 = vlaneseq
        %v389 = vshrl.u32 %v388, 7
        %v390 = vsub.s32 0, %v389
        %v391 = vrot.slane %v359, %v390
        %v400 = vadd.f32 %v363, %v306
        %v401 = vadd.f32 %v363, %v308
        %v402 = vadd.f32 %v367, %v306
        %v403 = vadd.f32 %v367, %v308
        %v404 = vadd.f32 %v371, %v306
        %v405 = vadd.f32 %v371, %v308
        %v406 = vadd.f32 %v375, %v306
        %v407 = vadd.f32 %v375, %v308
        %v408 = vadd.f32 %v379, %v306
        %v409 = vadd.f32 %v379, %v308
        %v410 = vadd.f32 %v383, %v306
        %v411 = vadd.f32 %v383, %v308
        %v412 = vadd.f32 %v387, %v306
        %v413 = vadd.f32 %v387, %v308
        %v414 = vadd.f32 %v391, %v306
        %v415 = vadd.f32 %v391, %v308
        %v417 = vcombine.high %v303, %v303
        %v419 = vunpack.c.l.s4 1966171168
        %v420 = vunpack.c.0.s8 %v419
        %v421 = vlaneseq
        %v422 = vshrl.u32 %v421, 7
        %v423 = vsub.s32 %v420, %v422
        %v424 = vrot.slane %v303, %v423
        %v426 = vunpack.c.l.s4 1966171168
        %v427 = vunpack.c.0.s8 %v426
        %v428 = vlaneseq
        %v429 = vshrl.u32 %v428, 7
        %v430 = vsub.s32 %v427, %v429
        %v431 = vrot.slane %v417, %v430
        %v432 = vcombine.high %v424, %v424
        %v433 = vcombine.high %v431, %v431
        %v435 = vunpack.c.l.s4 1966171168
        %v436 = vunpack.c.0.s8 %v435
        %v437 = vlaneseq
        %v438 = vshrl.u32 %v437, 7
        %v439 = vsub.s32 %v436, %v438
        %v440 = vrot.slane %v424, %v439
        %v442 = vunpack.c.l.s4 1966171168
        %v443 = vunpack.c.0.s8 %v442
        %v444 = vlaneseq
        %v445 = vshrl.u32 %v444, 7
        %v446 = vsub.s32 %v443, %v445
        %v447 = vrot.slane %v431, %v446
        %v449 = vunpack.c.l.s4 1966171168
        %v450 = vunpack.c.0.s8 %v449
        %v451 = vlaneseq
        %v452 = vshrl.u32 %v451, 7
        %v453 = vsub.s32 %v450, %v452
        %v454 = vrot.slane %v432, %v453
        %v456 = vunpack.c.l.s4 1966171168
        %v457 = vunpack.c.0.s8 %v456
        %v458 = vlaneseq
        %v459 = vshrl.u32 %v458, 7
        %v460 = vsub.s32 %v457, %v459
        %v461 = vrot.slane %v433, %v460
        %v462 = vcombine.high %v440, %v440
        %v463 = vcombine.high %v447, %v447
        %v464 = vcombine.high %v454, %v454
        %v465 = vcombine.high %v461, %v461
        %v466 = vlaneseq
        %v467 = vshrl.u32 %v466, 7
        %v468 = vsub.s32 0, %v467
        %v469 = vrot.slane %v440, %v468
        %v470 = vlaneseq
        %v471 = vshrl.u32 %v470, 7
        %v472 = vsub.s32 0, %v471
        %v473 = vrot.slane %v454, %v472
        %v474 = vlaneseq
        %v475 = vshrl.u32 %v474, 7
        %v476 = vsub.s32 0, %v475
        %v477 = vrot.slane %v462, %v476
        %v478 = vlaneseq
        %v479 = vshrl.u32 %v478, 7
        %v480 = vsub.s32 0, %v479
        %v481 = vrot.slane %v464, %v480
        %v482 = vlaneseq
        %v483 = vshrl.u32 %v482, 7
        %v484 = vsub.s32 0, %v483
        %v485 = vrot.slane %v447, %v484
        %v486 = vlaneseq
        %v487 = vshrl.u32 %v486, 7
        %v488 = vsub.s32 0, %v487
        %v489 = vrot.slane %v461, %v488
        %v490 = vlaneseq
        %v491 = vshrl.u32 %v490, 7
        %v492 = vsub.s32 0, %v491
        %v493 = vrot.slane %v463, %v492
        %v494 = vlaneseq
        %v495 = vshrl.u32 %v494, 7
        %v496 = vsub.s32 0, %v495
        %v497 = vrot.slane %v465, %v496
        %v506 = vadd.f32 %v469, %v307
        %v507 = vadd.f32 %v469, %v309
        %v508 = vadd.f32 %v473, %v307
        %v509 = vadd.f32 %v473, %v309
        %v510 = vadd.f32 %v477, %v307
        %v511 = vadd.f32 %v477, %v309
        %v512 = vadd.f32 %v481, %v307
        %v513 = vadd.f32 %v481, %v309
        %v514 = vadd.f32 %v485, %v307
        %v515 = vadd.f32 %v485, %v309
        %v516 = vadd.f32 %v489, %v307
        %v517 = vadd.f32 %v489, %v309
        %v518 = vadd.f32 %v493, %v307
        %v519 = vadd.f32 %v493, %v309
        %v520 = vadd.f32 %v497, %v307
        %v521 = vadd.f32 %v497, %v309
        %v522 = vtanh.pop %v400
        %v523 = vtanh.pop %v401
        %v524 = vtanh.pop %v402
        %v525 = vtanh.pop %v403
        %v526 = vtanh.pop %v404
        %v527 = vtanh.pop %v405
        %v528 = vtanh.pop %v406
        %v529 = vtanh.pop %v407
        %v530 = vtanh.pop %v408
        %v531 = vtanh.pop %v409
        %v532 = vtanh.pop %v410
        %v533 = vtanh.pop %v411
        %v534 = vtanh.pop %v412
        %v535 = vtanh.pop %v413
        %v536 = vtanh.pop %v414
        %v537 = vtanh.pop %v415
        %v538 = vxor.u32 %v506, 2147483648
        %v539 = vxor.u32 %v507, 2147483648
        %v540 = vxor.u32 %v508, 2147483648
        %v541 = vxor.u32 %v509, 2147483648
        %v542 = vxor.u32 %v510, 2147483648
        %v543 = vxor.u32 %v511, 2147483648
        %v544 = vxor.u32 %v512, 2147483648
        %v545 = vxor.u32 %v513, 2147483648
        %v546 = vxor.u32 %v514, 2147483648
        %v547 = vxor.u32 %v515, 2147483648
        %v548 = vxor.u32 %v516, 2147483648
        %v549 = vxor.u32 %v517, 2147483648
        %v550 = vxor.u32 %v518, 2147483648
        %v551 = vxor.u32 %v519, 2147483648
        %v552 = vxor.u32 %v520, 2147483648
        %v553 = vxor.u32 %v521, 2147483648
        %v554 = vmul.f32 %v538, 1.442695
        %v555 = vpow.pop %v554
        %v556 = vmul.f32 %v539, 1.442695
        %v557 = vpow.pop %v556
        %v558 = vmul.f32 %v540, 1.442695
        %v559 = vpow.pop %v558
        %v560 = vmul.f32 %v541, 1.442695
        %v561 = vpow.pop %v560
        %v562 = vmul.f32 %v542, 1.442695
        %v563 = vpow.pop %v562
        %v564 = vmul.f32 %v543, 1.442695
        %v565 = vpow.pop %v564
        %v566 = vmul.f32 %v544, 1.442695
        %v567 = vpow.pop %v566
        %v568 = vmul.f32 %v545, 1.442695
        %v569 = vpow.pop %v568
        %v570 = vmul.f32 %v546, 1.442695
        %v571 = vpow.pop %v570
        %v572 = vmul.f32 %v547, 1.442695
        %v573 = vpow.pop %v572
        %v574 = vmul.f32 %v548, 1.442695
        %v575 = vpow.pop %v574
        %v576 = vmul.f32 %v549, 1.442695
        %v577 = vpow.pop %v576
        %v578 = vmul.f32 %v550, 1.442695
        %v579 = vpow.pop %v578
        %v580 = vmul.f32 %v551, 1.442695
        %v581 = vpow.pop %v580
        %v582 = vmul.f32 %v552, 1.442695
        %v583 = vpow.pop %v582
        %v584 = vmul.f32 %v553, 1.442695
        %v585 = vpow.pop %v584
        %v586 = vadd.f32 %v555, 1.0
        %v587 = vadd.f32 %v557, 1.0
        %v588 = vadd.f32 %v559, 1.0
        %v589 = vadd.f32 %v561, 1.0
        %v590 = vadd.f32 %v563, 1.0
        %v591 = vadd.f32 %v565, 1.0
        %v592 = vadd.f32 %v567, 1.0
        %v593 = vadd.f32 %v569, 1.0
        %v594 = vadd.f32 %v571, 1.0
        %v595 = vadd.f32 %v573, 1.0
        %v596 = vadd.f32 %v575, 1.0
        %v597 = vadd.f32 %v577, 1.0
        %v598 = vadd.f32 %v579, 1.0
        %v599 = vadd.f32 %v581, 1.0
        %v600 = vadd.f32 %v583, 1.0
        %v601 = vadd.f32 %v585, 1.0
        %v602 = vrcp.pop %v586
        %v603 = vmul.f32 1.0, %v602
        %v604 = vrcp.pop %v587
        %v605 = vmul.f32 1.0, %v604
        %v606 = vrcp.pop %v588
        %v607 = vmul.f32 1.0, %v606
        %v608 = vrcp.pop %v589
        %v609 = vmul.f32 1.0, %v608
        %v610 = vrcp.pop %v590
        %v611 = vmul.f32 1.0, %v610
        %v612 = vrcp.pop %v591
        %v613 = vmul.f32 1.0, %v612
        %v614 = vrcp.pop %v592
        %v615 = vmul.f32 1.0, %v614
        %v616 = vrcp.pop %v593
        %v617 = vmul.f32 1.0, %v616
        %v618 = vrcp.pop %v594
        %v619 = vmul.f32 1.0, %v618
        %v620 = vrcp.pop %v595
        %v621 = vmul.f32 1.0, %v620
        %v622 = vrcp.pop %v596
        %v623 = vmul.f32 1.0, %v622
        %v624 = vrcp.pop %v597
        %v625 = vmul.f32 1.0, %v624
        %v626 = vrcp.pop %v598
        %v627 = vmul.f32 1.0, %v626
        %v628 = vrcp.pop %v599
        %v629 = vmul.f32 1.0, %v628
        %v630 = vrcp.pop %v600
        %v631 = vmul.f32 1.0, %v630
        %v632 = vrcp.pop %v601
        %v633 = vmul.f32 1.0, %v632
        %v634 = vmul.f32 %v522, %v603
        %v635 = vmul.f32 %v523, %v605
        %v636 = vmul.f32 %v524, %v607
        %v637 = vmul.f32 %v525, %v609
        %v638 = vmul.f32 %v526, %v611
        %v639 = vmul.f32 %v527, %v613
        %v640 = vmul.f32 %v528, %v615
        %v641 = vmul.f32 %v529, %v617
        %v642 = vmul.f32 %v530, %v619
        %v643 = vmul.f32 %v531, %v621
        %v644 = vmul.f32 %v532, %v623
        %v645 = vmul.f32 %v533, %v625
        %v646 = vmul.f32 %v534, %v627
        %v647 = vmul.f32 %v535, %v629
        %v648 = vmul.f32 %v536, %v631
        %v649 = vmul.f32 %v537, %v633
        %v650 = vpack.c.bf16 %v635, %v634
        %v651 = vpack.c.bf16 %v637, %v636
        %v652 = vpack.c.bf16 %v639, %v638
        %v653 = vpack.c.bf16 %v641, %v640
        %v654 = vpack.c.bf16 %v643, %v642
        %v655 = vpack.c.bf16 %v645, %v644
        %v656 = vpack.c.bf16 %v647, %v646
        %v657 = vpack.c.bf16 %v649, %v648
        %v658 = vld [vmem:[#allocation7] sm:$0xf]
        %v659 = vld [vmem:[#allocation7 + $0x4] sm:$0xf]
        %v660 = vld [vmem:[#allocation7 + $0x8] sm:$0xf]
        %v661 = vld [vmem:[#allocation7 + $0xc] sm:$0xf]
        %v662 = vld [vmem:[#allocation7 + $0x10] sm:$0xf]
        %v663 = vld [vmem:[#allocation7 + $0x14] sm:$0xf]
        %v664 = vld [vmem:[#allocation7 + $0x18] sm:$0xf]
        %v665 = vld [vmem:[#allocation7 + $0x1c] sm:$0xf]
        %v666 = vld [vmem:[#allocation7 + $0x20] sm:$0xf]
        %v667 = vld [vmem:[#allocation7 + $0x24] sm:$0xf]
        %v668 = vld [vmem:[#allocation7 + $0x28] sm:$0xf]
        %v669 = vld [vmem:[#allocation7 + $0x2c] sm:$0xf]
        %v670 = vld [vmem:[#allocation7 + $0x30] sm:$0xf]
        %v671 = vld [vmem:[#allocation7 + $0x34] sm:$0xf]
        %v672 = vld [vmem:[#allocation7 + $0x38] sm:$0xf]
        %v673 = vld [vmem:[#allocation7 + $0x3c] sm:$0xf]
        %v674 = vld [vmem:[#allocation8] sm:$0x1]
        %v676 = vlaneseq
        %v677 = vshrl.u32 %v676, 7
        %v678 = vsub.s32 0, %v677
        %v679 = vrot.slane %v674, %v678
        %v697 = vunpack.c.l.b16 %v658
        %v698 = vunpack.c.l.b16 %v659
        %v699 = vunpack.c.l.b16 %v660
        %v700 = vunpack.c.l.b16 %v661
        %v701 = vunpack.c.l.b16 %v662
        %v702 = vunpack.c.l.b16 %v663
        %v703 = vunpack.c.l.b16 %v664
        %v704 = vunpack.c.l.b16 %v665
        %v705 = vunpack.c.l.b16 %v666
        %v706 = vunpack.c.l.b16 %v667
        %v707 = vunpack.c.l.b16 %v668
        %v708 = vunpack.c.l.b16 %v669
        %v709 = vunpack.c.l.b16 %v670
        %v710 = vunpack.c.l.b16 %v671
        %v711 = vunpack.c.l.b16 %v672
        %v712 = vunpack.c.l.b16 %v673
        %v713 = vpack.c.b16 %v698, %v697
        %v714 = vpack.c.b16 %v700, %v699
        %v715 = vpack.c.b16 %v702, %v701
        %v716 = vpack.c.b16 %v704, %v703
        %v717 = vpack.c.b16 %v706, %v705
        %v718 = vpack.c.b16 %v708, %v707
        %v719 = vpack.c.b16 %v710, %v709
        %v720 = vpack.c.b16 %v712, %v711
        %729 = vmatprep.subr.bf16.mxu0 0
        %730 = vmatpush1.bf16.msra.mxu0 %v713
        %731 = vmatprep.subr.bf16.mxu0 0
        %732 = vmatpush1.bf16.msra.mxu0 %v714
        %733 = vmatprep.subr.bf16.mxu0 0
        %734 = vmatpush1.bf16.msra.mxu0 %v715
        %735 = vmatprep.subr.bf16.mxu0 0
        %736 = vmatpush1.bf16.msra.mxu0 %v716
        %737 = vmatprep.subr.bf16.mxu0 0
        %738 = vmatpush1.bf16.msra.mxu0 %v717
        %739 = vmatprep.subr.bf16.mxu0 0
        %740 = vmatpush1.bf16.msra.mxu0 %v718
        %741 = vmatprep.subr.bf16.mxu0 0
        %742 = vmatpush1.bf16.msra.mxu0 %v719
        %743 = vmatprep.subr.bf16.mxu0 0
        %744 = vmatpush1.bf16.msra.mxu0 %v720
        %745 = vmatprep.subr.bf16.mxu0 0
        %746 = vmatpush1.bf16.msra.mxu0 0
        %747 = vmatprep.subr.bf16.mxu0 0
        %748 = vmatpush1.bf16.msra.mxu0 0
        %749 = vmatprep.subr.bf16.mxu0 0
        %750 = vmatpush1.bf16.msra.mxu0 0
        %751 = vmatprep.subr.bf16.mxu0 0
        %752 = vmatpush1.bf16.msra.mxu0 0
        %753 = vmatprep.subr.bf16.mxu0 0
        %754 = vmatpush1.bf16.msra.mxu0 0
        %755 = vmatprep.subr.bf16.mxu0 0
        %756 = vmatpush1.bf16.msra.mxu0 0
        %757 = vmatprep.subr.bf16.mxu0 0
        %758 = vmatpush1.bf16.msra.mxu0 0
        %759 = vmatprep.subr.bf16.mxu0 0
        %760 = vmatpush1.bf16.msra.mxu0 0
        %761 = vmatprep.mubr.bf16.mxu0 0
        %762 = vmatmul.mubr.bf16.gmra.mrb[0].mxu0 %v650
        %v763 = vpop.f32.mrb[0].mxu0
        %v764 = vadd.f32 %v679, %v763
        %v765 = vpop.f32.mrb[0].mxu0
        %v766 = vpop.f32.mrb[0].mxu0
        %v767 = vadd.f32 %v679, %v766
        %v768 = vpop.f32.mrb[0].mxu0
        %769 = vmatprep.mubr.bf16.mxu0 0
        %770 = vmatmul.mubr.bf16.gmra.mrb[0].mxu0 %v651
        %v771 = vpop.f32.mrb[0].mxu0
        %v772 = vadd.f32 %v679, %v771
        %v773 = vpop.f32.mrb[0].mxu0
        %v774 = vpop.f32.mrb[0].mxu0
        %v775 = vadd.f32 %v679, %v774
        %v776 = vpop.f32.mrb[0].mxu0
        %777 = vmatprep.mubr.bf16.mxu0 0
        %778 = vmatmul.mubr.bf16.gmra.mrb[0].mxu0 %v652
        %v779 = vpop.f32.mrb[0].mxu0
        %v780 = vadd.f32 %v679, %v779
        %v781 = vpop.f32.mrb[0].mxu0
        %v782 = vpop.f32.mrb[0].mxu0
        %v783 = vadd.f32 %v679, %v782
        %v784 = vpop.f32.mrb[0].mxu0
        %785 = vmatprep.mubr.bf16.mxu0 0
        %786 = vmatmul.mubr.bf16.gmra.mrb[0].mxu0 %v653
        %v787 = vpop.f32.mrb[0].mxu0
        %v788 = vadd.f32 %v679, %v787
        %v789 = vpop.f32.mrb[0].mxu0
        %v790 = vpop.f32.mrb[0].mxu0
        %v791 = vadd.f32 %v679, %v790
        %v792 = vpop.f32.mrb[0].mxu0
        %793 = vmatprep.mubr.bf16.mxu0 0
        %794 = vmatmul.mubr.bf16.gmra.mrb[0].mxu0 %v654
        %v795 = vpop.f32.mrb[0].mxu0
        %v796 = vadd.f32 %v679, %v795
        %v797 = vpop.f32.mrb[0].mxu0
        %v798 = vpop.f32.mrb[0].mxu0
        %v799 = vadd.f32 %v679, %v798
        %v800 = vpop.f32.mrb[0].mxu0
        %801 = vmatprep.mubr.bf16.mxu0 0
        %802 = vmatmul.mubr.bf16.gmra.mrb[0].mxu0 %v655
        %v803 = vpop.f32.mrb[0].mxu0
        %v804 = vadd.f32 %v679, %v803
        %v805 = vpop.f32.mrb[0].mxu0
        %v806 = vpop.f32.mrb[0].mxu0
        %v807 = vadd.f32 %v679, %v806
        %v808 = vpop.f32.mrb[0].mxu0
        %809 = vmatprep.mubr.bf16.mxu0 0
        %810 = vmatmul.mubr.bf16.gmra.mrb[0].mxu0 %v656
        %v811 = vpop.f32.mrb[0].mxu0
        %v812 = vadd.f32 %v679, %v811
        %v813 = vpop.f32.mrb[0].mxu0
        %v814 = vpop.f32.mrb[0].mxu0
        %v815 = vadd.f32 %v679, %v814
        %v816 = vpop.f32.mrb[0].mxu0
        %817 = vmatprep.mubr.bf16.mxu0 0
        %818 = vmatmul.mubr.bf16.gmra.mrb[0].mxu0 %v657
        %v819 = vpop.f32.mrb[0].mxu0
        %v820 = vadd.f32 %v679, %v819
        %v821 = vpop.f32.mrb[0].mxu0
        %v822 = vpop.f32.mrb[0].mxu0
        %v823 = vadd.f32 %v679, %v822
        %v824 = vpop.f32.mrb[0].mxu0
        %825 = vdwg.mxu0
        %826 = vmax.xlane.f32.xlu0 %v764
        %v827 = vpop.xlane.xlu0 %826
        %828 = vmax.xlane.f32.xlu0 %v767
        %v829 = vpop.xlane.xlu0 %828
        %830 = vmax.xlane.f32.xlu0 %v772
        %v831 = vpop.xlane.xlu0 %830
        %832 = vmax.xlane.f32.xlu0 %v775
        %v833 = vpop.xlane.xlu0 %832
        %834 = vmax.xlane.f32.xlu0 %v780
        %v835 = vpop.xlane.xlu0 %834
        %836 = vmax.xlane.f32.xlu0 %v783
        %v837 = vpop.xlane.xlu0 %836
        %838 = vmax.xlane.f32.xlu0 %v788
        %v839 = vpop.xlane.xlu0 %838
        %840 = vmax.xlane.f32.xlu0 %v791
        %v841 = vpop.xlane.xlu0 %840
        %842 = vmax.xlane.f32.xlu0 %v796
        %v843 = vpop.xlane.xlu0 %842
        %844 = vmax.xlane.f32.xlu0 %v799
        %v845 = vpop.xlane.xlu0 %844
        %846 = vmax.xlane.f32.xlu0 %v804
        %v847 = vpop.xlane.xlu0 %846
        %848 = vmax.xlane.f32.xlu0 %v807
        %v849 = vpop.xlane.xlu0 %848
        %850 = vmax.xlane.f32.xlu0 %v812
        %v851 = vpop.xlane.xlu0 %850
        %852 = vmax.xlane.f32.xlu0 %v815
        %v853 = vpop.xlane.xlu0 %852
        %854 = vmax.xlane.f32.xlu0 %v820
        %v855 = vpop.xlane.xlu0 %854
        %856 = vmax.xlane.f32.xlu0 %v823
        %v857 = vpop.xlane.xlu0 %856
        %v858 = vsub.f32 %v764, %v827
        %v859 = vsub.f32 %v767, %v829
        %v860 = vsub.f32 %v772, %v831
        %v861 = vsub.f32 %v775, %v833
        %v862 = vsub.f32 %v780, %v835
        %v863 = vsub.f32 %v783, %v837
        %v864 = vsub.f32 %v788, %v839
        %v865 = vsub.f32 %v791, %v841
        %v866 = vsub.f32 %v796, %v843
        %v867 = vsub.f32 %v799, %v845
        %v868 = vsub.f32 %v804, %v847
        %v869 = vsub.f32 %v807, %v849
        %v870 = vsub.f32 %v812, %v851
        %v871 = vsub.f32 %v815, %v853
        %v872 = vsub.f32 %v820, %v855
        %v873 = vsub.f32 %v823, %v857
        %v874 = vmul.f32 %v858, 1.442695
        %v875 = vpow.pop %v874
        %v876 = vmul.f32 %v859, 1.442695
        %v877 = vpow.pop %v876
        %v878 = vmul.f32 %v860, 1.442695
        %v879 = vpow.pop %v878
        %v880 = vmul.f32 %v861, 1.442695
        %v881 = vpow.pop %v880
        %v882 = vmul.f32 %v862, 1.442695
        %v883 = vpow.pop %v882
        %v884 = vmul.f32 %v863, 1.442695
        %v885 = vpow.pop %v884
        %v886 = vmul.f32 %v864, 1.442695
        %v887 = vpow.pop %v886
        %v888 = vmul.f32 %v865, 1.442695
        %v889 = vpow.pop %v888
        %v890 = vmul.f32 %v866, 1.442695
        %v891 = vpow.pop %v890
        %v892 = vmul.f32 %v867, 1.442695
        %v893 = vpow.pop %v892
        %v894 = vmul.f32 %v868, 1.442695
        %v895 = vpow.pop %v894
        %v896 = vmul.f32 %v869, 1.442695
        %v897 = vpow.pop %v896
        %v898 = vmul.f32 %v870, 1.442695
        %v899 = vpow.pop %v898
        %v900 = vmul.f32 %v871, 1.442695
        %v901 = vpow.pop %v900
        %v902 = vmul.f32 %v872, 1.442695
        %v903 = vpow.pop %v902
        %v904 = vmul.f32 %v873, 1.442695
        %v905 = vpow.pop %v904
        %906 = vadd.xlane.f32.xlu0 %v875
        %v907 = vpop.xlane.xlu0 %906
        %908 = vadd.xlane.f32.xlu0 %v877
        %v909 = vpop.xlane.xlu0 %908
        %910 = vadd.xlane.f32.xlu0 %v879
        %v911 = vpop.xlane.xlu0 %910
        %912 = vadd.xlane.f32.xlu0 %v881
        %v913 = vpop.xlane.xlu0 %912
        %914 = vadd.xlane.f32.xlu0 %v883
        %v915 = vpop.xlane.xlu0 %914
        %916 = vadd.xlane.f32.xlu0 %v885
        %v917 = vpop.xlane.xlu0 %916
        %918 = vadd.xlane.f32.xlu0 %v887
        %v919 = vpop.xlane.xlu0 %918
        %920 = vadd.xlane.f32.xlu0 %v889
        %v921 = vpop.xlane.xlu0 %920
        %922 = vadd.xlane.f32.xlu0 %v891
        %v923 = vpop.xlane.xlu0 %922
        %924 = vadd.xlane.f32.xlu0 %v893
        %v925 = vpop.xlane.xlu0 %924
        %926 = vadd.xlane.f32.xlu0 %v895
        %v927 = vpop.xlane.xlu0 %926
        %928 = vadd.xlane.f32.xlu0 %v897
        %v929 = vpop.xlane.xlu0 %928
        %930 = vadd.xlane.f32.xlu0 %v899
        %v931 = vpop.xlane.xlu0 %930
        %932 = vadd.xlane.f32.xlu0 %v901
        %v933 = vpop.xlane.xlu0 %932
        %934 = vadd.xlane.f32.xlu0 %v903
        %v935 = vpop.xlane.xlu0 %934
        %936 = vadd.xlane.f32.xlu0 %v905
        %v937 = vpop.xlane.xlu0 %936
        %v938 = vlog2.pop %v907
        %v939 = vmul.f32 %v938, 0.6931472
        %v940 = vlog2.pop %v909
        %v941 = vmul.f32 %v940, 0.6931472
        %v942 = vlog2.pop %v911
        %v943 = vmul.f32 %v942, 0.6931472
        %v944 = vlog2.pop %v913
        %v945 = vmul.f32 %v944, 0.6931472
        %v946 = vlog2.pop %v915
        %v947 = vmul.f32 %v946, 0.6931472
        %v948 = vlog2.pop %v917
        %v949 = vmul.f32 %v948, 0.6931472
        %v950 = vlog2.pop %v919
        %v951 = vmul.f32 %v950, 0.6931472
        %v952 = vlog2.pop %v921
        %v953 = vmul.f32 %v952, 0.6931472
        %v954 = vlog2.pop %v923
        %v955 = vmul.f32 %v954, 0.6931472
        %v956 = vlog2.pop %v925
        %v957 = vmul.f32 %v956, 0.6931472
        %v958 = vlog2.pop %v927
        %v959 = vmul.f32 %v958, 0.6931472
        %v960 = vlog2.pop %v929
        %v961 = vmul.f32 %v960, 0.6931472
        %v962 = vlog2.pop %v931
        %v963 = vmul.f32 %v962, 0.6931472
        %v964 = vlog2.pop %v933
        %v965 = vmul.f32 %v964, 0.6931472
        %v966 = vlog2.pop %v935
        %v967 = vmul.f32 %v966, 0.6931472
        %v968 = vlog2.pop %v937
        %v969 = vmul.f32 %v968, 0.6931472
        %v970 = vsub.f32 %v858, %v939
        %v971 = vsub.f32 %v859, %v941
        %v972 = vsub.f32 %v860, %v943
        %v973 = vsub.f32 %v861, %v945
        %v974 = vsub.f32 %v862, %v947
        %v975 = vsub.f32 %v863, %v949
        %v976 = vsub.f32 %v864, %v951
        %v977 = vsub.f32 %v865, %v953
        %v978 = vsub.f32 %v866, %v955
        %v979 = vsub.f32 %v867, %v957
        %v980 = vsub.f32 %v868, %v959
        %v981 = vsub.f32 %v869, %v961
        %v982 = vsub.f32 %v870, %v963
        %v983 = vsub.f32 %v871, %v965
        %v984 = vsub.f32 %v872, %v967
        %v985 = vsub.f32 %v873, %v969
        %986 = vst [vmem:[%s298] sm:$0xff] %v970
        %987 = vst [vmem:[%s298 + $0x8] sm:$0xff] %v971
        %988 = vst [vmem:[%s298 + $0x10] sm:$0xff] %v972
        %989 = vst [vmem:[%s298 + $0x18] sm:$0xff] %v973
        %990 = vst [vmem:[%s298 + $0x20] sm:$0xff] %v974
        %991 = vst [vmem:[%s298 + $0x28] sm:$0xff] %v975
        %992 = vst [vmem:[%s298 + $0x30] sm:$0xff] %v976
        %993 = vst [vmem:[%s298 + $0x38] sm:$0xff] %v977
        %994 = vst [vmem:[%s298 + $0x40] sm:$0xff] %v978
        %995 = vst [vmem:[%s298 + $0x48] sm:$0xff] %v979
        %996 = vst [vmem:[%s298 + $0x50] sm:$0xff] %v980
        %997 = vst [vmem:[%s298 + $0x58] sm:$0xff] %v981
        %998 = vst [vmem:[%s298 + $0x60] sm:$0xff] %v982
        %999 = vst [vmem:[%s298 + $0x68] sm:$0xff] %v983
        %1000 = vst [vmem:[%s298 + $0x70] sm:$0xff] %v984
        %1001 = vst [vmem:[%s298 + $0x78] sm:$0xff] %v985
        %s1002 = sand.u32 %s143, 1
        %s1003 = scalar_lea.sflag [#allocation4], %s1002
        %s1004 = sand.u32 %s143, 1
        %s1005 = smul.addr %s1004, 128
        %s1006 = scalar_lea.vmem [#allocation10], %s1005
        // Predicated region
        $region53: #{tpu_custom_call.1} parent=35 // pred_check
          %p1007 = pneg %p153
        $region54: #{tpu_custom_call.1} parent=35 // pred_check_branch
          %1009 = sbr.rel (%p1007) target = $region56
        $region55: #{tpu_custom_call.1} parent=35 // pred_region
          %s1010 = smul.u32 8, %s30
          %s1012 = ssub.s32 2048, 2048
          %1013 = vsyncadd %s1003, %s1012
          %s1014 = smul.addr %s1010, 2
          %s1015 = smul.addr %s29, 16
          %s1016 = sadd.s32 %s1014, %s1015
          %s1017 = smul.addr %s1016, 128
          %s1018 = scalar_lea.hbm %s4, %s1017
          %s1019 = sshll.u32 %s1006, 4
          %s1020 = int_to_ptr.vmem [resolvable:$true] %s1019
          %1025 = dma.vmem_to_hbm [thread:$0]  %s1020, 2048, %s1018, %s1003, 128, 128, 8
        $region56: #{tpu_custom_call.1} parent=35 // pred_fallthru
          _
      $region36: #{tpu_custom_call.1} parent=5 // pred_fallthru
        _
      %p1026 = scmp.le.s32.totalorder 2, %s20
      // Predicated region
      $region57: #{tpu_custom_call.1} parent=5 // pred_check
        %p1027 = pneg %p1026
      $region58: #{tpu_custom_call.1} parent=5 // pred_check_branch
        %1029 = sbr.rel (%p1027) target = $region60
      $region59: #{tpu_custom_call.1} parent=5 // pred_region
        %s1030 = ssub.s32 %s20, 2
        // Predicated region
        $region61: #{tpu_custom_call.1} parent=59 // pred_check
          %p1031 = pneg %p159
        $region62: #{tpu_custom_call.1} parent=59 // pred_check_branch
          %1033 = sbr.rel (%p1031) target = $region64
        $region63: #{tpu_custom_call.1} parent=59 // pred_region
          %s1034 = sand.u32 %s144, 1
          %s1035 = scalar_lea.sflag [#allocation4], %s1034
          %s1036 = sand.u32 %s144, 1
          %s1037 = smul.addr %s1036, 128
          %s1038 = scalar_lea.vmem [#allocation10], %s1037
          %1039 = dma.done %s1035, 2048
        $region64: #{tpu_custom_call.1} parent=59 // pred_fallthru
          _
      $region60: #{tpu_custom_call.1} parent=5 // pred_fallthru
        _
    $region6: #{tpu_custom_call.1} parent=1 // loop_footer
      %s24 = sadd.s32 1, %s20
    $region7: #{tpu_custom_call.1} parent=1 // loop_footer_branch
      %19 = sbr.rel target = $region3
    $region8: #{tpu_custom_call.1} parent=1 // loop_exit
      _
    %1040 = vsyncpa [#allocation3], 1
    %s1041 = scalar_lea.sflag [#allocation3], 1
    %1042 = vsyncpa %s1041, 1
    %1043 = vsyncpa [#allocation6], 1
    %s1044 = scalar_lea.sflag [#allocation6], 1
    %1045 = vsyncpa %s1044, 1
    %1046 = vsyncpa [#allocation9], 1
    %1047 = vsyncpa [#allocation4], 1
    %s1048 = scalar_lea.sflag [#allocation4], 1
    %1049 = vsyncpa %s1048, 1

</llo_original>
